<compile_context>
chip_gen: v7x
topology: tpu7x:2x2x1
jax: 0.10.0
libtpu: 0.0.40
codegen_flags: <defaults>
</compile_context>

<pallas_src>
import functools
import math

import jax
import jax.numpy as jnp
from jax import lax
from jax.experimental import pallas as pl
from jax.experimental.pallas import tpu as pltpu


_VMEM_LIMIT_BYTES = 32 * 1024 * 1024   # explicit scoped-VMEM budget (raises v5e's 16 MiB default)


# ------------------------------ tiling helpers -------------------------------


def _pick_tile(dim, target, align):
    """Largest power-of-two tile <= target that divides dim (>= align), else full dim."""
    if dim <= target:
        return dim
    t = target
    while t > align and dim % t != 0:
        t //= 2
    return t if dim % t == 0 else dim


def _pick_parallel_tile(dim, target, align):
    """Like _pick_tile, but keep >= 2 grid steps on parallel axes when the dim allows it,
    so v7x's two TensorCores both get work (harmless on single-TC v5e/v6e)."""
    t = _pick_tile(dim, target, align)
    if dim // t < 2 and dim % 2 == 0 and (dim // 2) % align == 0 and dim // 2 >= align:
        t = dim // 2
    return t


# --------------------------- tiled linear (matmul) ----------------------------


def _linear_kernel(x_ref, w_ref, b_ref, o_ref, acc_ref, *, compute_dtype):
    @pl.when(pl.program_id(2) == 0)
    def _init():
        acc_ref[...] = jnp.zeros_like(acc_ref)

    acc_ref[...] += jnp.dot(
        x_ref[...].astype(compute_dtype),          # no-op cast: activations arrive in compute_dtype
        w_ref[...].astype(compute_dtype),
        preferred_element_type=jnp.float32,
    )

    @pl.when(pl.program_id(2) == pl.num_programs(2) - 1)
    def _finalize():
        o_ref[...] = (acc_ref[...] + b_ref[...].astype(jnp.float32)).astype(o_ref.dtype)


def pallas_linear(x, w_t, b, *, compute_dtype, out_dtype, tm=512, tn=256, tk=512):
    """x:(M,K) @ w_t:(K,N) + b:(N,)  (== F.linear(x, W, b) with w_t = W.T)."""
    M, K = x.shape
    K2, N = w_t.shape
    assert K == K2
    tm = _pick_parallel_tile(M, tm, 8)
    tn = _pick_tile(N, tn, 128)
    tk = _pick_tile(K, tk, 128)
    grid = (M // tm, N // tn, K // tk)
    w_spec_kwargs = {}
    if K // tk >= 4:
        # deeper weight-tile buffering hides exposed DMA behind the MXU on long K loops
        w_spec_kwargs = dict(pipeline_mode=pl.Buffered(3))
    return pl.pallas_call(
        functools.partial(_linear_kernel, compute_dtype=compute_dtype),
        out_shape=jax.ShapeDtypeStruct((M, N), out_dtype),
        grid=grid,
        in_specs=[
            pl.BlockSpec((tm, tk), lambda i, j, k: (i, k)),
            pl.BlockSpec((tk, tn), lambda i, j, k: (k, j), **w_spec_kwargs),
            pl.BlockSpec((1, tn), lambda i, j, k: (0, j)),
        ],
        out_specs=pl.BlockSpec((tm, tn), lambda i, j, k: (i, j)),
        scratch_shapes=[pltpu.VMEM((tm, tn), jnp.float32)],
        compiler_params=pltpu.CompilerParams(
            dimension_semantics=("parallel", "parallel", "arbitrary"),
            vmem_limit_bytes=_VMEM_LIMIT_BYTES),
    )(x, w_t, b.reshape(1, N))


# ----------- tiled linear fused with residual-add + LayerNorm epilogue --------


def _linear_ln_kernel(x_ref, w_ref, b_ref, r_ref, g_ref, bb_ref, o_ref, acc_ref,
                      *, compute_dtype, eps):
    k = pl.program_id(1)

    @pl.when(k == 0)
    def _init():
        acc_ref[...] = jnp.zeros_like(acc_ref)

    acc_ref[...] += jnp.dot(
        x_ref[...].astype(compute_dtype),
        w_ref[...].astype(compute_dtype),
        preferred_element_type=jnp.float32,
    )

    @pl.when(k == pl.num_programs(1) - 1)
    def _finalize():
        # bias + residual add, then LayerNorm -- all statistics in f32
        z = acc_ref[...] + b_ref[...].astype(jnp.float32) + r_ref[...].astype(jnp.float32)
        mu = jnp.mean(z, axis=-1, keepdims=True)
        zc = z - mu
        var = jnp.mean(zc * zc, axis=-1, keepdims=True)
        o_ref[...] = (zc * lax.rsqrt(var + eps) * g_ref[...].astype(jnp.float32)
                      + bb_ref[...].astype(jnp.float32)).astype(o_ref.dtype)


def pallas_linear_add_layernorm(x, w_t, b, residual, gamma, beta, *,
                                compute_dtype, out_dtype, eps=1e-5, tm=512, tk=512):
    """LayerNorm(residual + (x @ w_t + b)) with the LN fused into the matmul epilogue.
    The output width N is kept un-tiled so the full LN row lives in one block."""
    M, K = x.shape
    K2, N = w_t.shape
    assert K == K2 and residual.shape == (M, N)
    tm = _pick_parallel_tile(M, tm, 8)
    tk = _pick_tile(K, tk, 128)
    grid = (M // tm, K // tk)
    w_spec_kwargs = {}
    if K // tk >= 4:
        w_spec_kwargs = dict(pipeline_mode=pl.Buffered(3))
    return pl.pallas_call(
        functools.partial(_linear_ln_kernel, compute_dtype=compute_dtype, eps=eps),
        out_shape=jax.ShapeDtypeStruct((M, N), out_dtype),
        grid=grid,
        in_specs=[
            pl.BlockSpec((tm, tk), lambda i, k: (i, k)),
            pl.BlockSpec((tk, N), lambda i, k: (k, 0), **w_spec_kwargs),
            pl.BlockSpec((1, N), lambda i, k: (0, 0)),
            pl.BlockSpec((tm, N), lambda i, k: (i, 0)),
            pl.BlockSpec((1, N), lambda i, k: (0, 0)),
            pl.BlockSpec((1, N), lambda i, k: (0, 0)),
        ],
        out_specs=pl.BlockSpec((tm, N), lambda i, k: (i, 0)),
        scratch_shapes=[pltpu.VMEM((tm, N), jnp.float32)],
        compiler_params=pltpu.CompilerParams(
            dimension_semantics=("parallel", "arbitrary"),
            vmem_limit_bytes=_VMEM_LIMIT_BYTES),
    )(x, w_t, b.reshape(1, N), residual, gamma.reshape(1, N), beta.reshape(1, N))


# ------------------------- multi-head self-attention --------------------------


def _make_attn_kernel(n_head, head_dim, compute_dtype):
    E = n_head * head_dim
    scale = 1.0 / math.sqrt(head_dim)

    def kernel(qkv_ref, o_ref):
        qkv = qkv_ref[0]                                   # (T, 3E) lane-dense block
        outs = []
        for h in range(n_head):                            # few heads -> static unroll
            lo = h * head_dim
            hi = lo + head_dim
            qh = qkv[:, lo:hi]                                               # (T, hd)
            kh = qkv[:, E + lo:E + hi]                                       # (S, hd)
            vh = qkv[:, 2 * E + lo:2 * E + hi]                               # (S, hd)
            # scores = (q @ k^T) / sqrt(head_dim), f32 accumulation on the MXU;
            # scale applied on the f32 scores (more precise than scaling bf16 q).
            s = lax.dot_general(qh, kh, (((1,), (1,)), ((), ())),
                                preferred_element_type=jnp.float32) * scale  # (T, S)
            m = jnp.max(s, axis=-1, keepdims=True)
            p = jnp.exp(s - m)
            l = jnp.sum(p, axis=-1, keepdims=True)
            pv = jnp.dot(p.astype(compute_dtype), vh,
                         preferred_element_type=jnp.float32)                 # (T, hd)
            # fold 1/l into the PV epilogue (EUP approx reciprocal)
            outs.append(pv * pl.reciprocal(l, approx=True))
        # single lane-dense store of the full (T, E) row block
        o_ref[0] = jnp.concatenate(outs, axis=-1).astype(o_ref.dtype)

    return kernel


def pallas_self_attention(qkv, n_head, *, compute_dtype, out_dtype):
    """qkv: (B, T, 3E) (q|k|v concatenated along last dim, batch-first) -> (B, T, E)."""
    B, T, threeE = qkv.shape
    E = threeE // 3
    head_dim = E // n_head
    assert head_dim * n_head == E
    # TODO(synk): flash-tile over (T, S) with online softmax + head-major QKV layout for
    #             long sequences / large heads (v7x VMEM budget, MXU lane utilization).
    return pl.pallas_call(
        _make_attn_kernel(n_head, head_dim, compute_dtype),
        out_shape=jax.ShapeDtypeStruct((B, T, E), out_dtype),
        grid=(B,),
        in_specs=[pl.BlockSpec((1, T, threeE), lambda b: (b, 0, 0))],
        out_specs=pl.BlockSpec((1, T, E), lambda b: (b, 0, 0)),
        compiler_params=pltpu.CompilerParams(
            dimension_semantics=("parallel",),
            vmem_limit_bytes=_VMEM_LIMIT_BYTES),
    )(qkv)


# ------------------------------ encoder layers ---------------------------------


def encoder_layer_forward(x, p, n_head, compute_dtype):
    """One TransformerEncodeLayer on batch-first (B, T, E) activations in compute_dtype."""
    B, T, E = x.shape
    x2 = x.reshape(B * T, E)

    # --- multi-head self-attention (query == key == value -> fused QKV projection) ---
    qkv = pallas_linear(x2, p["w_qkv_t"], p["b_qkv"],
                        compute_dtype=compute_dtype, out_dtype=compute_dtype)   # (B*T, 3E)
    attn = pallas_self_attention(qkv.reshape(B, T, 3 * E), n_head,
                                 compute_dtype=compute_dtype, out_dtype=compute_dtype)

    # --- output projection fused with residual-add + LayerNorm 1 (dropout = identity) ---
    h = pallas_linear_add_layernorm(attn.reshape(B * T, E), p["w_out_t"], p["b_out"],
                                    x2, p["ln1_g"], p["ln1_b"],
                                    compute_dtype=compute_dtype, out_dtype=compute_dtype)

    # --- feed-forward: original forward never applies self.activate, so line2(line1(h))
    #     is pre-folded into one (E, E) linear; fused with residual-add + LayerNorm 2 ---
    out = pallas_linear_add_layernorm(h, p["w_ff_t"], p["b_ff"],
                                      h, p["ln2_g"], p["ln2_b"],
                                      compute_dtype=compute_dtype, out_dtype=compute_dtype)
    return out.reshape(B, T, E)


def positional_encoding_table(max_len, embed_dim):
    pos = jnp.arange(max_len, dtype=jnp.float32)[:, None]
    div = jnp.power(10000.0, jnp.arange(0, embed_dim, 2, dtype=jnp.float32) / embed_dim)
    angles = pos / div                                     # (max_len, embed_dim//2)
    tbl = jnp.zeros((max_len, embed_dim), jnp.float32)
    tbl = tbl.at[:, 0::2].set(jnp.sin(angles))
    tbl = tbl.at[:, 1::2].set(jnp.cos(angles))
    return tbl


@functools.partial(jax.jit, static_argnames=("n_head", "compute_dtype"))
def transformer_encoder_forward(token_ids, params, n_head, compute_dtype=jnp.bfloat16):
    """token_ids: (seq, batch) int32 -> (seq, batch, d_model) in compute_dtype.

    Internally all activations are kept batch-first (B, T, E) so the attention kernel can
    grid over batch without any per-layer transposes; a single transpose at the end
    restores the module's seq-first output convention.
    """
    # TODO(synk): embedding gather + positional-encoding add left to XLA (no tiled-matmul
    #             structure to exploit); dropout layers treated as inference (identity).
    x = jnp.take(params["emb_table"], token_ids.T, axis=0)       # (B, T, E) f32
    T = token_ids.shape[0]
    x = x + params["pos_table"][:T][None, :, :]
    x = x.astype(compute_dtype)                                   # cast once, flows bf16/f32
    for layer_params in params["layers"]:
        x = encoder_layer_forward(x, layer_params, n_head, compute_dtype)
    return x.transpose(1, 0, 2)                                   # (T, B, E) seq-first


# --------------------------- pure-JAX f32 reference ----------------------------


def _layer_norm_ref(x, g, b, eps=1e-5):
    mu = jnp.mean(x, axis=-1, keepdims=True)
    var = jnp.mean((x - mu) ** 2, axis=-1, keepdims=True)
    return (x - mu) * lax.rsqrt(var + eps) * g + b


def reference_encoder_forward(token_ids, params, n_head):
    x = jnp.take(params["emb_table"], token_ids, axis=0)
    T, B, E = x.shape
    x = x + params["pos_table"][:T][:, None, :]
    hd = E // n_head
    for p in params["layers"]:
        x2 = x.reshape(T * B, E)
        qkv = x2 @ p["w_qkv_t"] + p["b_qkv"]
        q, k, v = jnp.split(qkv, 3, axis=-1)

        def to_heads(t):
            return t.reshape(T, B * n_head, hd).transpose(1, 0, 2)

        qh = to_heads(q) / math.sqrt(hd)
        kh, vh = to_heads(k), to_heads(v)
        s = jnp.einsum("btd,bsd->bts", qh, kh)
        a = jax.nn.softmax(s, axis=-1)
        o = jnp.einsum("bts,bsd->btd", a, vh)
        o = o.transpose(1, 0, 2).reshape(T * B, E)
        attn = o @ p["w_out_t"] + p["b_out"]
        h = _layer_norm_ref(x2 + attn, p["ln1_g"], p["ln1_b"])
        ff = (h @ p["w1_t"] + p["b1"]) @ p["w2_t"] + p["b2"]     # no activation (as in spec)
        x = _layer_norm_ref(h + ff, p["ln2_g"], p["ln2_b"]).reshape(T, B, E)
    return x


# -------------------------------- param builder ---------------------------------


def init_params(key, *, vocab, max_len, d_model, n_head, dim_ff, num_layers):
    del n_head  # init does not depend on heads
    keys = jax.random.split(key, 1 + num_layers)
    emb_table = jax.random.normal(keys[0], (vocab, d_model), jnp.float32)
    layers = []
    for li in range(num_layers):
        k = jax.random.split(keys[1 + li], 6)
        bound_in = math.sqrt(6.0 / (3 * d_model + d_model))          # xavier_uniform_
        in_proj_w = jax.random.uniform(k[0], (3 * d_model, d_model), jnp.float32,
                                       -bound_in, bound_in)
        bound_out = 1.0 / math.sqrt(d_model)
        out_proj_w = jax.random.uniform(k[1], (d_model, d_model), jnp.float32,
                                        -bound_out, bound_out)
        b1w = 1.0 / math.sqrt(d_model)
        w1 = jax.random.uniform(k[2], (dim_ff, d_model), jnp.float32, -b1w, b1w)
        b1 = jax.random.uniform(k[3], (dim_ff,), jnp.float32, -b1w, b1w)
        b2w = 1.0 / math.sqrt(dim_ff)
        w2 = jax.random.uniform(k[4], (d_model, dim_ff), jnp.float32, -b2w, b2w)
        b2 = jax.random.uniform(k[5], (d_model,), jnp.float32, -b2w, b2w)
        w1_t, w2_t = w1.T, w2.T
        # Activation-free FFN pre-fold (exactly line2(line1(x)) since the original
        # forward never applies self.activate); computed once at HIGHEST precision.
        w_ff_t = jnp.dot(w1_t, w2_t, precision=lax.Precision.HIGHEST)        # (E, E)
        b_ff = jnp.dot(b1, w2_t, precision=lax.Precision.HIGHEST) + b2       # (E,)
        layers.append({
            "w_qkv_t": in_proj_w.T,                      # (E, 3E): fused q|k|v projection
            "b_qkv": jnp.zeros((3 * d_model,), jnp.float32),
            "w_out_t": out_proj_w.T,
            "b_out": jnp.zeros((d_model,), jnp.float32),
            "ln1_g": jnp.ones((d_model,), jnp.float32),
            "ln1_b": jnp.zeros((d_model,), jnp.float32),
            "w_ff_t": w_ff_t, "b_ff": b_ff,              # folded FFN used by the kernels
            "w1_t": w1_t, "b1": b1,                      # unfolded FFN kept for the reference
            "w2_t": w2_t, "b2": b2,
            "ln2_g": jnp.ones((d_model,), jnp.float32),
            "ln2_b": jnp.zeros((d_model,), jnp.float32),
        })
    return {
        "emb_table": emb_table,
        "pos_table": positional_encoding_table(max_len, d_model),
        "layers": layers,
    }


# -------------------------------------- main ------------------------------------

if __name__ == "__main__":
    d_model, n_head, dim_ff = 128, 4, 256
    num_layers, vocab, max_len = 2, 64, 32
    seq, batch = 16, 2

    root = jax.random.PRNGKey(0)
    k_param, k_ids = jax.random.split(root)
    params = init_params(k_param, vocab=vocab, max_len=max_len, d_model=d_model,
                         n_head=n_head, dim_ff=dim_ff, num_layers=num_layers)
    token_ids = jax.random.randint(k_ids, (seq, batch), 0, vocab, dtype=jnp.int32)

    ref = reference_encoder_forward(token_ids, params, n_head)

    # --- f32 MXU operands (reference-precision parity path) ---
    out = transformer_encoder_forward(token_ids, params, n_head=n_head,
                                      compute_dtype=jnp.float32)
    out = jax.block_until_ready(out)
    assert out.shape == (seq, batch, d_model)
    assert bool(jnp.all(jnp.isfinite(out)))
    max_err = float(jnp.max(jnp.abs(out - ref)))
    assert jnp.allclose(out, ref, rtol=1e-2, atol=1e-2), f"f32 mismatch: max|err|={max_err}"

    # --- bf16 end-to-end fast path: bf16 weights, bf16 activations, f32 accumulation ---
    def _cast_layer_weights(layer):
        cast = dict(layer)
        for name in ("w_qkv_t", "w_out_t", "w_ff_t"):
            cast[name] = layer[name].astype(jnp.bfloat16)
        return cast

    params_bf16 = dict(params)
    params_bf16["layers"] = [_cast_layer_weights(lp) for lp in params["layers"]]
    out_bf16 = transformer_encoder_forward(token_ids, params_bf16, n_head=n_head,
                                           compute_dtype=jnp.bfloat16)
    out_bf16 = jax.block_until_ready(out_bf16)
    assert out_bf16.shape == (seq, batch, d_model)
    assert bool(jnp.all(jnp.isfinite(out_bf16.astype(jnp.float32))))
    assert float(jnp.max(jnp.abs(out_bf16 - ref))) < 0.5  # loose sanity bound for bf16

    print("KERNEL_OK")
</pallas_src>

<mosaic_0001>
module attributes {stable_mosaic.version = 11 : i64} {
  func.func @_linear_kernel(%arg0: i32, %arg1: i32, %arg2: i32, %arg3: memref<16x128xf32, #tpu.memory_space<vmem>>, %arg4: memref<128x128xf32, #tpu.memory_space<vmem>>, %arg5: memref<1x128xf32, #tpu.memory_space<vmem>>, %arg6: memref<16x128xf32, #tpu.memory_space<vmem>>, %arg7: memref<16x128xf32, #tpu.memory_space<vmem>>) attributes {dimension_semantics = [#tpu.dimension_semantics<parallel>, #tpu.dimension_semantics<parallel>, #tpu.dimension_semantics<arbitrary>], iteration_bounds = array<i64: 2, 3, 1>, scalar_prefetch = 0 : i64, scratch_operands = 1 : i64, tpu.core_type = #tpu.core_type<tc>, window_params = [{transform_indices = @transform_0, window_bounds = array<i64: 16, 128>}, {transform_indices = @transform_1, window_bounds = array<i64: 128, 128>}, {transform_indices = @transform_2, window_bounds = array<i64: 1, 128>}, {transform_indices = @transform_3, window_bounds = array<i64: 16, 128>}]} {
    %c0_i32 = arith.constant 0 : i32
    %0 = arith.cmpi eq, %arg2, %c0_i32 : i32
    %1 = arith.extui %0 : i1 to i32
    %c0_i32_0 = arith.constant 0 : i32
    %2 = arith.cmpi ne, %1, %c0_i32_0 : i32
    scf.if %2 {
      %cst_10 = arith.constant 0.000000e+00 : f32
      %12 = vector.broadcast %cst_10 : f32 to vector<16x128xf32>
      %c0_11 = arith.constant 0 : index
      %c0_12 = arith.constant 0 : index
      %13 = vector.load %arg7[%c0_11, %c0_12] : memref<16x128xf32, #tpu.memory_space<vmem>>, vector<16x128xf32>
      tpu.vector_store %arg7[%c0_11, %c0_12], %12 {strides = array<i32>} : memref<16x128xf32, #tpu.memory_space<vmem>>, vector<16x128xf32>,
    } else {
    }
    %c0 = arith.constant 0 : index
    %c0_1 = arith.constant 0 : index
    %3 = vector.load %arg7[%c0, %c0_1] : memref<16x128xf32, #tpu.memory_space<vmem>>, vector<16x128xf32>
    %c0_2 = arith.constant 0 : index
    %c0_3 = arith.constant 0 : index
    %4 = vector.load %arg3[%c0_2, %c0_3] : memref<16x128xf32, #tpu.memory_space<vmem>>, vector<16x128xf32>
    %c0_4 = arith.constant 0 : index
    %c0_5 = arith.constant 0 : index
    %5 = vector.load %arg4[%c0_4, %c0_5] : memref<128x128xf32, #tpu.memory_space<vmem>>, vector<128x128xf32>
    %cst = arith.constant dense<0.000000e+00> : vector<16x128xf32>
    %6 = tpu.matmul %4, %5, %cst {dimension_numbers = #tpu.dot_dimension_numbers<[1], [0], [0], [1], [0, 0, 1, 1], [], []>} : vector<16x128xf32>, vector<128x128xf32>, vector<16x128xf32> -> vector<16x128xf32>
    %7 = arith.addf %3, %6 : vector<16x128xf32>
    %c0_6 = arith.constant 0 : index
    %c0_7 = arith.constant 0 : index
    %8 = vector.load %arg7[%c0_6, %c0_7] : memref<16x128xf32, #tpu.memory_space<vmem>>, vector<16x128xf32>
    tpu.vector_store %arg7[%c0_6, %c0_7], %7 {strides = array<i32>} : memref<16x128xf32, #tpu.memory_space<vmem>>, vector<16x128xf32>,
    %c0_i32_8 = arith.constant 0 : i32
    %9 = arith.cmpi eq, %arg2, %c0_i32_8 : i32
    %10 = arith.extui %9 : i1 to i32
    %c0_i32_9 = arith.constant 0 : i32
    %11 = arith.cmpi ne, %10, %c0_i32_9 : i32
    scf.if %11 {
      %c0_10 = arith.constant 0 : index
      %c0_11 = arith.constant 0 : index
      %12 = vector.load %arg7[%c0_10, %c0_11] : memref<16x128xf32, #tpu.memory_space<vmem>>, vector<16x128xf32>
      %c0_12 = arith.constant 0 : index
      %c0_13 = arith.constant 0 : index
      %13 = vector.load %arg5[%c0_12, %c0_13] : memref<1x128xf32, #tpu.memory_space<vmem>>, vector<1x128xf32>
      %14 = vector.broadcast %13 : vector<1x128xf32> to vector<16x128xf32>
      %15 = arith.addf %12, %14 : vector<16x128xf32>
      %c0_14 = arith.constant 0 : index
      %c0_15 = arith.constant 0 : index
      %16 = vector.load %arg6[%c0_14, %c0_15] : memref<16x128xf32, #tpu.memory_space<vmem>>, vector<16x128xf32>
      tpu.vector_store %arg6[%c0_14, %c0_15], %15 {strides = array<i32>} : memref<16x128xf32, #tpu.memory_space<vmem>>, vector<16x128xf32>,
    } else {
    }
    return
  }
  func.func @transform_0(%arg0: i32, %arg1: i32, %arg2: i32) -> (i32, i32) {
    %c0_i32 = arith.constant 0 : i32
    return %arg0, %arg2 : i32, i32
  }
  func.func @transform_1(%arg0: i32, %arg1: i32, %arg2: i32) -> (i32, i32) {
    %c0_i32 = arith.constant 0 : i32
    return %arg2, %arg1 : i32, i32
  }
  func.func @transform_2(%arg0: i32, %arg1: i32, %arg2: i32) -> (i32, i32) {
    %c0_i32 = arith.constant 0 : i32
    %c0_i32_0 = arith.constant 0 : i32
    return %c0_i32, %arg1 : i32, i32
  }
  func.func @transform_3(%arg0: i32, %arg1: i32, %arg2: i32) -> (i32, i32) {
    %c0_i32 = arith.constant 0 : i32
    return %arg0, %arg1 : i32, i32
  }
}

module attributes {stable_mosaic.version = 11 : i64} {
  func.func @_linear_ln_kernel(%arg0: i32, %arg1: i32, %arg2: memref<16x128xf32, #tpu.memory_space<vmem>>, %arg3: memref<128x128xf32, #tpu.memory_space<vmem>>, %arg4: memref<1x128xf32, #tpu.memory_space<vmem>>, %arg5: memref<16x128xf32, #tpu.memory_space<vmem>>, %arg6: memref<1x128xf32, #tpu.memory_space<vmem>>, %arg7: memref<1x128xf32, #tpu.memory_space<vmem>>, %arg8: memref<16x128xf32, #tpu.memory_space<vmem>>, %arg9: memref<16x128xf32, #tpu.memory_space<vmem>>) attributes {dimension_semantics = [#tpu.dimension_semantics<parallel>, #tpu.dimension_semantics<arbitrary>], iteration_bounds = array<i64: 2, 1>, scalar_prefetch = 0 : i64, scratch_operands = 1 : i64, tpu.core_type = #tpu.core_type<tc>, window_params = [{transform_indices = @transform_0, window_bounds = array<i64: 16, 128>}, {transform_indices = @transform_1, window_bounds = array<i64: 128, 128>}, {pipeline_mode = #tpu.pipeline_mode<synchronous>, transform_indices = @transform_2, window_bounds = array<i64: 1, 128>}, {transform_indices = @transform_3, window_bounds = array<i64: 16, 128>}, {pipeline_mode = #tpu.pipeline_mode<synchronous>, transform_indices = @transform_4, window_bounds = array<i64: 1, 128>}, {pipeline_mode = #tpu.pipeline_mode<synchronous>, transform_indices = @transform_5, window_bounds = array<i64: 1, 128>}, {transform_indices = @transform_6, window_bounds = array<i64: 16, 128>}]} {
    %c0_i32 = arith.constant 0 : i32
    %0 = arith.cmpi eq, %arg1, %c0_i32 : i32
    %1 = arith.extui %0 : i1 to i32
    %c0_i32_0 = arith.constant 0 : i32
    %2 = arith.cmpi ne, %1, %c0_i32_0 : i32
    scf.if %2 {
      %cst_10 = arith.constant 0.000000e+00 : f32
      %12 = vector.broadcast %cst_10 : f32 to vector<16x128xf32>
      %c0_11 = arith.constant 0 : index
      %c0_12 = arith.constant 0 : index
      %13 = vector.load %arg9[%c0_11, %c0_12] : memref<16x128xf32, #tpu.memory_space<vmem>>, vector<16x128xf32>
      tpu.vector_store %arg9[%c0_11, %c0_12], %12 {strides = array<i32>} : memref<16x128xf32, #tpu.memory_space<vmem>>, vector<16x128xf32>,
    } else {
    }
    %c0 = arith.constant 0 : index
    %c0_1 = arith.constant 0 : index
    %3 = vector.load %arg9[%c0, %c0_1] : memref<16x128xf32, #tpu.memory_space<vmem>>, vector<16x128xf32>
    %c0_2 = arith.constant 0 : index
    %c0_3 = arith.constant 0 : index
    %4 = vector.load %arg2[%c0_2, %c0_3] : memref<16x128xf32, #tpu.memory_space<vmem>>, vector<16x128xf32>
    %c0_4 = arith.constant 0 : index
    %c0_5 = arith.constant 0 : index
    %5 = vector.load %arg3[%c0_4, %c0_5] : memref<128x128xf32, #tpu.memory_space<vmem>>, vector<128x128xf32>
    %cst = arith.constant dense<0.000000e+00> : vector<16x128xf32>
    %6 = tpu.matmul %4, %5, %cst {dimension_numbers = #tpu.dot_dimension_numbers<[1], [0], [0], [1], [0, 0, 1, 1], [], []>} : vector<16x128xf32>, vector<128x128xf32>, vector<16x128xf32> -> vector<16x128xf32>
    %7 = arith.addf %3, %6 : vector<16x128xf32>
    %c0_6 = arith.constant 0 : index
    %c0_7 = arith.constant 0 : index
    %8 = vector.load %arg9[%c0_6, %c0_7] : memref<16x128xf32, #tpu.memory_space<vmem>>, vector<16x128xf32>
    tpu.vector_store %arg9[%c0_6, %c0_7], %7 {strides = array<i32>} : memref<16x128xf32, #tpu.memory_space<vmem>>, vector<16x128xf32>,
    %c0_i32_8 = arith.constant 0 : i32
    %9 = arith.cmpi eq, %arg1, %c0_i32_8 : i32
    %10 = arith.extui %9 : i1 to i32
    %c0_i32_9 = arith.constant 0 : i32
    %11 = arith.cmpi ne, %10, %c0_i32_9 : i32
    scf.if %11 {
      %c0_10 = arith.constant 0 : index
      %c0_11 = arith.constant 0 : index
      %12 = vector.load %arg9[%c0_10, %c0_11] : memref<16x128xf32, #tpu.memory_space<vmem>>, vector<16x128xf32>
      %c0_12 = arith.constant 0 : index
      %c0_13 = arith.constant 0 : index
      %13 = vector.load %arg4[%c0_12, %c0_13] : memref<1x128xf32, #tpu.memory_space<vmem>>, vector<1x128xf32>
      %14 = vector.broadcast %13 : vector<1x128xf32> to vector<16x128xf32>
      %15 = arith.addf %12, %14 : vector<16x128xf32>
      %c0_14 = arith.constant 0 : index
      %c0_15 = arith.constant 0 : index
      %16 = vector.load %arg5[%c0_14, %c0_15] : memref<16x128xf32, #tpu.memory_space<vmem>>, vector<16x128xf32>
      %17 = arith.addf %15, %16 : vector<16x128xf32>
      %cst_16 = arith.constant dense<0.000000e+00> : vector<16xf32>
      %18 = vector.multi_reduction <add>, %17, %cst_16 [1] : vector<16x128xf32> to vector<16xf32>
      %19 = vector.shape_cast %18 : vector<16xf32> to vector<16x1xf32>
      %cst_17 = arith.constant 1.280000e+02 : f32
      %20 = vector.broadcast %cst_17 : f32 to vector<16x1xf32>
      %21 = arith.divf %19, %20 : vector<16x1xf32>
      %22 = vector.broadcast %21 : vector<16x1xf32> to vector<16x128xf32>
      %23 = arith.subf %17, %22 : vector<16x128xf32>
      %24 = arith.mulf %23, %23 : vector<16x128xf32>
      %cst_18 = arith.constant dense<0.000000e+00> : vector<16xf32>
      %25 = vector.multi_reduction <add>, %24, %cst_18 [1] : vector<16x128xf32> to vector<16xf32>
      %26 = vector.shape_cast %25 : vector<16xf32> to vector<16x1xf32>
      %cst_19 = arith.constant 1.280000e+02 : f32
      %27 = vector.broadcast %cst_19 : f32 to vector<16x1xf32>
      %28 = arith.divf %26, %27 : vector<16x1xf32>
      %cst_20 = arith.constant 9.99999974E-6 : f32
      %29 = vector.broadcast %cst_20 : f32 to vector<16x1xf32>
      %30 = arith.addf %28, %29 : vector<16x1xf32>
      %31 = math.rsqrt %30 : vector<16x1xf32>
      %32 = vector.broadcast %31 : vector<16x1xf32> to vector<16x128xf32>
      %33 = arith.mulf %23, %32 : vector<16x128xf32>
      %c0_21 = arith.constant 0 : index
      %c0_22 = arith.constant 0 : index
      %34 = vector.load %arg6[%c0_21, %c0_22] : memref<1x128xf32, #tpu.memory_space<vmem>>, vector<1x128xf32>
      %35 = vector.broadcast %34 : vector<1x128xf32> to vector<16x128xf32>
      %36 = arith.mulf %33, %35 : vector<16x128xf32>
      %c0_23 = arith.constant 0 : index
      %c0_24 = arith.constant 0 : index
      %37 = vector.load %arg7[%c0_23, %c0_24] : memref<1x128xf32, #tpu.memory_space<vmem>>, vector<1x128xf32>
      %38 = vector.broadcast %37 : vector<1x128xf32> to vector<16x128xf32>
      %39 = arith.addf %36, %38 : vector<16x128xf32>
      %c0_25 = arith.constant 0 : index
      %c0_26 = arith.constant 0 : index
      %40 = vector.load %arg8[%c0_25, %c0_26] : memref<16x128xf32, #tpu.memory_space<vmem>>, vector<16x128xf32>
      tpu.vector_store %arg8[%c0_25, %c0_26], %39 {strides = array<i32>} : memref<16x128xf32, #tpu.memory_space<vmem>>, vector<16x128xf32>,
    } else {
    }
    return
  }
  func.func @transform_0(%arg0: i32, %arg1: i32) -> (i32, i32) {
    %c0_i32 = arith.constant 0 : i32
    return %arg0, %arg1 : i32, i32
  }
  func.func @transform_1(%arg0: i32, %arg1: i32) -> (i32, i32) {
    %c0_i32 = arith.constant 0 : i32
    %c0_i32_0 = arith.constant 0 : i32
    return %arg1, %c0_i32 : i32, i32
  }
  func.func @transform_2(%arg0: i32, %arg1: i32) -> (i32, i32) {
    %c0_i32 = arith.constant 0 : i32
    %c0_i32_0 = arith.constant 0 : i32
    %c0_i32_1 = arith.constant 0 : i32
    return %c0_i32, %c0_i32_0 : i32, i32
  }
  func.func @transform_3(%arg0: i32, %arg1: i32) -> (i32, i32) {
    %c0_i32 = arith.constant 0 : i32
    %c0_i32_0 = arith.constant 0 : i32
    return %arg0, %c0_i32 : i32, i32
  }
  func.func @transform_4(%arg0: i32, %arg1: i32) -> (i32, i32) {
    %c0_i32 = arith.constant 0 : i32
    %c0_i32_0 = arith.constant 0 : i32
    %c0_i32_1 = arith.constant 0 : i32
    return %c0_i32, %c0_i32_0 : i32, i32
  }
  func.func @transform_5(%arg0: i32, %arg1: i32) -> (i32, i32) {
    %c0_i32 = arith.constant 0 : i32
    %c0_i32_0 = arith.constant 0 : i32
    %c0_i32_1 = arith.constant 0 : i32
    return %c0_i32, %c0_i32_0 : i32, i32
  }
  func.func @transform_6(%arg0: i32, %arg1: i32) -> (i32, i32) {
    %c0_i32 = arith.constant 0 : i32
    %c0_i32_0 = arith.constant 0 : i32
    return %arg0, %c0_i32 : i32, i32
  }
}

module attributes {stable_mosaic.version = 11 : i64} {
  func.func @kernel(%arg0: i32, %arg1: memref<1x16x384xf32, #tpu.memory_space<vmem>>, %arg2: memref<1x16x128xf32, #tpu.memory_space<vmem>>) attributes {dimension_semantics = [#tpu.dimension_semantics<parallel>], iteration_bounds = array<i64: 2>, scalar_prefetch = 0 : i64, scratch_operands = 0 : i64, tpu.core_type = #tpu.core_type<tc>, window_params = [{transform_indices = @transform_0, window_bounds = array<i64: 1, 16, 384>}, {transform_indices = @transform_1, window_bounds = array<i64: 1, 16, 128>}]} {
    %c0 = arith.constant 0 : index
    %c0_0 = arith.constant 0 : index
    %c0_1 = arith.constant 0 : index
    %0 = vector.load %arg1[%c0, %c0_0, %c0_1] : memref<1x16x384xf32, #tpu.memory_space<vmem>>, vector<1x16x384xf32>
    %1 = vector.shape_cast %0 : vector<1x16x384xf32> to vector<16x384xf32>
    %2 = vector.extract_strided_slice %1 {offsets = [0, 0], sizes = [16, 32], strides = [1, 1]} : vector<16x384xf32> to vector<16x32xf32>
    %3 = vector.extract_strided_slice %1 {offsets = [0, 128], sizes = [16, 32], strides = [1, 1]} : vector<16x384xf32> to vector<16x32xf32>
    %4 = vector.extract_strided_slice %1 {offsets = [0, 256], sizes = [16, 32], strides = [1, 1]} : vector<16x384xf32> to vector<16x32xf32>
    %cst = arith.constant dense<0.000000e+00> : vector<16x16xf32>
    %5 = tpu.matmul %2, %3, %cst {dimension_numbers = #tpu.dot_dimension_numbers<[1], [1], [0], [0], [0, 0, 1, 0], [], []>} : vector<16x32xf32>, vector<16x32xf32>, vector<16x16xf32> -> vector<16x16xf32>
    %cst_2 = arith.constant 0.176776692 : f32
    %6 = vector.broadcast %cst_2 : f32 to vector<16x16xf32>
    %7 = arith.mulf %5, %6 : vector<16x16xf32>
    %cst_3 = arith.constant dense<0xFF800000> : vector<16xf32>
    %8 = vector.multi_reduction <maximumf>, %7, %cst_3 [1] : vector<16x16xf32> to vector<16xf32>
    %9 = vector.shape_cast %8 : vector<16xf32> to vector<16x1xf32>
    %10 = vector.broadcast %9 : vector<16x1xf32> to vector<16x16xf32>
    %11 = arith.subf %7, %10 : vector<16x16xf32>
    %12 = math.exp %11 : vector<16x16xf32>
    %cst_4 = arith.constant dense<0.000000e+00> : vector<16xf32>
    %13 = vector.multi_reduction <add>, %12, %cst_4 [1] : vector<16x16xf32> to vector<16xf32>
    %14 = vector.shape_cast %13 : vector<16xf32> to vector<16x1xf32>
    %cst_5 = arith.constant dense<0.000000e+00> : vector<16x32xf32>
    %15 = tpu.matmul %12, %4, %cst_5 {dimension_numbers = #tpu.dot_dimension_numbers<[1], [0], [0], [1], [0, 0, 1, 1], [], []>} : vector<16x16xf32>, vector<16x32xf32>, vector<16x32xf32> -> vector<16x32xf32>
    %16 = tpu.reciprocal %14 {approx = true} : vector<16x1xf32> -> vector<16x1xf32>
    %17 = vector.broadcast %16 : vector<16x1xf32> to vector<16x32xf32>
    %18 = arith.mulf %15, %17 : vector<16x32xf32>
    %19 = vector.extract_strided_slice %1 {offsets = [0, 32], sizes = [16, 32], strides = [1, 1]} : vector<16x384xf32> to vector<16x32xf32>
    %20 = vector.extract_strided_slice %1 {offsets = [0, 160], sizes = [16, 32], strides = [1, 1]} : vector<16x384xf32> to vector<16x32xf32>
    %21 = vector.extract_strided_slice %1 {offsets = [0, 288], sizes = [16, 32], strides = [1, 1]} : vector<16x384xf32> to vector<16x32xf32>
    %cst_6 = arith.constant dense<0.000000e+00> : vector<16x16xf32>
    %22 = tpu.matmul %19, %20, %cst_6 {dimension_numbers = #tpu.dot_dimension_numbers<[1], [1], [0], [0], [0, 0, 1, 0], [], []>} : vector<16x32xf32>, vector<16x32xf32>, vector<16x16xf32> -> vector<16x16xf32>
    %cst_7 = arith.constant 0.176776692 : f32
    %23 = vector.broadcast %cst_7 : f32 to vector<16x16xf32>
    %24 = arith.mulf %22, %23 : vector<16x16xf32>
    %cst_8 = arith.constant dense<0xFF800000> : vector<16xf32>
    %25 = vector.multi_reduction <maximumf>, %24, %cst_8 [1] : vector<16x16xf32> to vector<16xf32>
    %26 = vector.shape_cast %25 : vector<16xf32> to vector<16x1xf32>
    %27 = vector.broadcast %26 : vector<16x1xf32> to vector<16x16xf32>
    %28 = arith.subf %24, %27 : vector<16x16xf32>
    %29 = math.exp %28 : vector<16x16xf32>
    %cst_9 = arith.constant dense<0.000000e+00> : vector<16xf32>
    %30 = vector.multi_reduction <add>, %29, %cst_9 [1] : vector<16x16xf32> to vector<16xf32>
    %31 = vector.shape_cast %30 : vector<16xf32> to vector<16x1xf32>
    %cst_10 = arith.constant dense<0.000000e+00> : vector<16x32xf32>
    %32 = tpu.matmul %29, %21, %cst_10 {dimension_numbers = #tpu.dot_dimension_numbers<[1], [0], [0], [1], [0, 0, 1, 1], [], []>} : vector<16x16xf32>, vector<16x32xf32>, vector<16x32xf32> -> vector<16x32xf32>
    %33 = tpu.reciprocal %31 {approx = true} : vector<16x1xf32> -> vector<16x1xf32>
    %34 = vector.broadcast %33 : vector<16x1xf32> to vector<16x32xf32>
    %35 = arith.mulf %32, %34 : vector<16x32xf32>
    %36 = vector.extract_strided_slice %1 {offsets = [0, 64], sizes = [16, 32], strides = [1, 1]} : vector<16x384xf32> to vector<16x32xf32>
    %37 = vector.extract_strided_slice %1 {offsets = [0, 192], sizes = [16, 32], strides = [1, 1]} : vector<16x384xf32> to vector<16x32xf32>
    %38 = vector.extract_strided_slice %1 {offsets = [0, 320], sizes = [16, 32], strides = [1, 1]} : vector<16x384xf32> to vector<16x32xf32>
    %cst_11 = arith.constant dense<0.000000e+00> : vector<16x16xf32>
    %39 = tpu.matmul %36, %37, %cst_11 {dimension_numbers = #tpu.dot_dimension_numbers<[1], [1], [0], [0], [0, 0, 1, 0], [], []>} : vector<16x32xf32>, vector<16x32xf32>, vector<16x16xf32> -> vector<16x16xf32>
    %cst_12 = arith.constant 0.176776692 : f32
    %40 = vector.broadcast %cst_12 : f32 to vector<16x16xf32>
    %41 = arith.mulf %39, %40 : vector<16x16xf32>
    %cst_13 = arith.constant dense<0xFF800000> : vector<16xf32>
    %42 = vector.multi_reduction <maximumf>, %41, %cst_13 [1] : vector<16x16xf32> to vector<16xf32>
    %43 = vector.shape_cast %42 : vector<16xf32> to vector<16x1xf32>
    %44 = vector.broadcast %43 : vector<16x1xf32> to vector<16x16xf32>
    %45 = arith.subf %41, %44 : vector<16x16xf32>
    %46 = math.exp %45 : vector<16x16xf32>
    %cst_14 = arith.constant dense<0.000000e+00> : vector<16xf32>
    %47 = vector.multi_reduction <add>, %46, %cst_14 [1] : vector<16x16xf32> to vector<16xf32>
    %48 = vector.shape_cast %47 : vector<16xf32> to vector<16x1xf32>
    %cst_15 = arith.constant dense<0.000000e+00> : vector<16x32xf32>
    %49 = tpu.matmul %46, %38, %cst_15 {dimension_numbers = #tpu.dot_dimension_numbers<[1], [0], [0], [1], [0, 0, 1, 1], [], []>} : vector<16x16xf32>, vector<16x32xf32>, vector<16x32xf32> -> vector<16x32xf32>
    %50 = tpu.reciprocal %48 {approx = true} : vector<16x1xf32> -> vector<16x1xf32>
    %51 = vector.broadcast %50 : vector<16x1xf32> to vector<16x32xf32>
    %52 = arith.mulf %49, %51 : vector<16x32xf32>
    %53 = vector.extract_strided_slice %1 {offsets = [0, 96], sizes = [16, 32], strides = [1, 1]} : vector<16x384xf32> to vector<16x32xf32>
    %54 = vector.extract_strided_slice %1 {offsets = [0, 224], sizes = [16, 32], strides = [1, 1]} : vector<16x384xf32> to vector<16x32xf32>
    %55 = vector.extract_strided_slice %1 {offsets = [0, 352], sizes = [16, 32], strides = [1, 1]} : vector<16x384xf32> to vector<16x32xf32>
    %cst_16 = arith.constant dense<0.000000e+00> : vector<16x16xf32>
    %56 = tpu.matmul %53, %54, %cst_16 {dimension_numbers = #tpu.dot_dimension_numbers<[1], [1], [0], [0], [0, 0, 1, 0], [], []>} : vector<16x32xf32>, vector<16x32xf32>, vector<16x16xf32> -> vector<16x16xf32>
    %cst_17 = arith.constant 0.176776692 : f32
    %57 = vector.broadcast %cst_17 : f32 to vector<16x16xf32>
    %58 = arith.mulf %56, %57 : vector<16x16xf32>
    %cst_18 = arith.constant dense<0xFF800000> : vector<16xf32>
    %59 = vector.multi_reduction <maximumf>, %58, %cst_18 [1] : vector<16x16xf32> to vector<16xf32>
    %60 = vector.shape_cast %59 : vector<16xf32> to vector<16x1xf32>
    %61 = vector.broadcast %60 : vector<16x1xf32> to vector<16x16xf32>
    %62 = arith.subf %58, %61 : vector<16x16xf32>
    %63 = math.exp %62 : vector<16x16xf32>
    %cst_19 = arith.constant dense<0.000000e+00> : vector<16xf32>
    %64 = vector.multi_reduction <add>, %63, %cst_19 [1] : vector<16x16xf32> to vector<16xf32>
    %65 = vector.shape_cast %64 : vector<16xf32> to vector<16x1xf32>
    %cst_20 = arith.constant dense<0.000000e+00> : vector<16x32xf32>
    %66 = tpu.matmul %63, %55, %cst_20 {dimension_numbers = #tpu.dot_dimension_numbers<[1], [0], [0], [1], [0, 0, 1, 1], [], []>} : vector<16x16xf32>, vector<16x32xf32>, vector<16x32xf32> -> vector<16x32xf32>
    %67 = tpu.reciprocal %65 {approx = true} : vector<16x1xf32> -> vector<16x1xf32>
    %68 = vector.broadcast %67 : vector<16x1xf32> to vector<16x32xf32>
    %69 = arith.mulf %66, %68 : vector<16x32xf32>
    %70 = tpu.concatenate %18, %35, %52, %69 in 1 : vector<16x32xf32>, vector<16x32xf32>, vector<16x32xf32>, vector<16x32xf32> -> vector<16x128xf32>
    %c0_21 = arith.constant 0 : index
    %c0_22 = arith.constant 0 : index
    %c0_23 = arith.constant 0 : index
    %71 = vector.load %arg2[%c0_21, %c0_22, %c0_23] : memref<1x16x128xf32, #tpu.memory_space<vmem>>, vector<1x16x128xf32>
    %72 = vector.shape_cast %71 : vector<1x16x128xf32> to vector<16x128xf32>
    %73 = vector.shape_cast %70 : vector<16x128xf32> to vector<1x16x128xf32>
    tpu.vector_store %arg2[%c0_21, %c0_22, %c0_23], %73 {strides = array<i32>} : memref<1x16x128xf32, #tpu.memory_space<vmem>>, vector<1x16x128xf32>,
    return
  }
  func.func @transform_0(%arg0: i32) -> (i32, i32, i32) {
    %c0_i32 = arith.constant 0 : i32
    %c0_i32_0 = arith.constant 0 : i32
    %c0_i32_1 = arith.constant 0 : i32
    return %arg0, %c0_i32, %c0_i32_0 : i32, i32, i32
  }
  func.func @transform_1(%arg0: i32) -> (i32, i32, i32) {
    %c0_i32 = arith.constant 0 : i32
    %c0_i32_0 = arith.constant 0 : i32
    %c0_i32_1 = arith.constant 0 : i32
    return %arg0, %c0_i32, %c0_i32_0 : i32, i32, i32
  }
}

</mosaic_0001>

<llo_original>
// kernel: transformer_encoder_forward.8
$region0: #{transformer_encoder_forward.8}
  #allocation0 [shape = 'u32[]', space=smem, size = 0x4, offset = 0x4, fixed_abs, tag = 'smem constant byte address 0x4 - core index']
  #allocation1 [shape = 'u32[144,128]{1,0:T(1,128)}', space=vmem, size = 0x12000, scoped, tag = 'internal scratch']
  #allocation2 [shape = 'f32[16,128]{1,0:T(8,128)}', space=vmem, size = 0x2000, scoped, tag = 'scratch operand']
  %s0 = inlined_call_operand.vmem [shape: f32[32,128], index: 0, kind: input, shape index: {}]
  %s1 = inlined_call_operand.vmem [shape: f32[128,384], index: 1, kind: input, shape index: {}]
  %s2 = inlined_call_operand.vmem [shape: f32[1,384], index: 2, kind: input, shape index: {}]
  %s3 = inlined_call_operand.vmem [shape: f32[32,384], index: 3, kind: output, shape index: {}]
  %s4 = sld [smem:[#allocation0]]
  $region125: #{transformer_encoder_forward.8} parent=0
    _
  %s6 = ssub.s32 1, %s4
  %s7 = scalar_select 0, %s6, %s4
  $region1: #{transformer_encoder_forward.8} parent=0
    #allocation3 [shape = 'u8[131072]{0}', space=vmem, size = 0x20000, scoped, tag = 'input window, operand 1']
    #allocation4 [shape = 'u8[16384]{0}', space=vmem, size = 0x4000, scoped, tag = 'output window, operand 0']
    loop: start=0, step=1, limit=8
    $region2: #{transformer_encoder_forward.8} parent=1 // loop_pre_header
      _
    $region3: #{transformer_encoder_forward.8} parent=1 // loop_header
      %s9 = sphi 0, %s13
      %p10 = scmp.ge.s32.totalorder %s9, 8
      %s16 = sphi 0, %s35
      %s17 = sphi 0, %s31
      %s18 = sphi 0, %s27
      %s19 = sphi 0, %s16
      %s20 = sphi 0, %s17
      %s21 = sphi 0, %s18
      %s22 = sphi 0, %s19
      %s23 = sphi 0, %s20
      %s24 = sphi 0, %s21
      %s40 = sphi 0, %s42
      %s43 = sphi 0, %s40
      %s44 = sphi 0, %s43
      %s60 = sphi 0, %s44
      %s68 = sphi 0, %s70
      %s71 = sphi 0, %s68
      %s72 = sphi 0, %s71
      %s88 = sphi 0, %s72
      %s94 = sphi 0, %s96
      %s97 = sphi 0, %s94
      %s98 = sphi 0, %s97
      %s114 = sphi 0, %s98
      %s122 = sphi 0, %s124
      %s125 = sphi 0, %s122
      %s126 = sphi 0, %s125
      %s142 = sphi 0, %s126
    $region4: #{transformer_encoder_forward.8} parent=1 // loop_header_branch
      %12 = sbr.rel (%p10) target = $region8
    $region5: #{transformer_encoder_forward.8} parent=1 // loop_body
      %s14 = ssub.s32 %s9, 1
      %s15 = ssub.s32 %s9, 2
      %s25 = sadd.s32 1, %s18
      %p26 = scmp.ge.s32.totalorder %s25, 1
      %s27 = scalar_select %p26, 0, %s25
      %s28 = sadd.s32 1, %s17
      %s29 = scalar_select %p26, %s28, %s17
      %p30 = scmp.ge.s32.totalorder %s29, 3
      %s31 = scalar_select %p30, 0, %s29
      %s32 = sadd.s32 1, %s16
      %s33 = scalar_select %p30, %s32, %s16
      %p34 = scmp.ge.s32.totalorder %s33, 2
      %s35 = scalar_select %p34, 0, %s33
      %s36 = ssub.s32 %s16, %s35
      %s37 = ssub.s32 %s18, %s27
      %s38 = sor.u32 %s36, %s37
      %p39 = scmp.eq.s32.totalorder %s38, 0
      %s41 = sadd.s32 %s40, 1
      %s42 = scalar_select %p39, %s40, %s41
      %p45 = pneg %p39
      %p46 = scmp.eq.s32.totalorder %s9, 5
      %p47 = por %p45, %p46
      %p48 = scmp.ne.s32.totalorder %s40, %s43
      %p49 = scmp.eq.s32.totalorder %s9, 0
      %p50 = por %p48, %p49
      %p51 = scmp.ne.s32.totalorder %s40, %s43
      %p52 = scmp.eq.s32.totalorder %s14, 5
      %p53 = por %p51, %p52
      %p54 = scmp.ne.s32.totalorder %s43, %s44
      %p55 = scmp.eq.s32.totalorder %s14, 0
      %p56 = por %p54, %p55
      %p57 = scmp.ne.s32.totalorder %s43, %s44
      %p58 = scmp.eq.s32.totalorder %s15, 5
      %p59 = por %p57, %p58
      %p61 = scmp.ne.s32.totalorder %s44, %s60
      %p62 = scmp.eq.s32.totalorder %s15, 0
      %p63 = por %p61, %p62
      %s64 = ssub.s32 %s18, %s27
      %s65 = ssub.s32 %s17, %s31
      %s66 = sor.u32 %s64, %s65
      %p67 = scmp.eq.s32.totalorder %s66, 0
      %s69 = sadd.s32 %s68, 1
      %s70 = scalar_select %p67, %s68, %s69
      %p73 = pneg %p67
      %p74 = scmp.eq.s32.totalorder %s9, 5
      %p75 = por %p73, %p74
      %p76 = scmp.ne.s32.totalorder %s68, %s71
      %p77 = scmp.eq.s32.totalorder %s9, 0
      %p78 = por %p76, %p77
      %p79 = scmp.ne.s32.totalorder %s68, %s71
      %p80 = scmp.eq.s32.totalorder %s14, 5
      %p81 = por %p79, %p80
      %p82 = scmp.ne.s32.totalorder %s71, %s72
      %p83 = scmp.eq.s32.totalorder %s14, 0
      %p84 = por %p82, %p83
      %p85 = scmp.ne.s32.totalorder %s71, %s72
      %p86 = scmp.eq.s32.totalorder %s15, 5
      %p87 = por %p85, %p86
      %p89 = scmp.ne.s32.totalorder %s72, %s88
      %p90 = scmp.eq.s32.totalorder %s15, 0
      %p91 = por %p89, %p90
      %s92 = ssub.s32 %s17, %s31
      %p93 = scmp.eq.s32.totalorder %s92, 0
      %s95 = sadd.s32 %s94, 1
      %s96 = scalar_select %p93, %s94, %s95
      %p99 = pneg %p93
      %p100 = scmp.eq.s32.totalorder %s9, 5
      %p101 = por %p99, %p100
      %p102 = scmp.ne.s32.totalorder %s94, %s97
      %p103 = scmp.eq.s32.totalorder %s9, 0
      %p104 = por %p102, %p103
      %p105 = scmp.ne.s32.totalorder %s94, %s97
      %p106 = scmp.eq.s32.totalorder %s14, 5
      %p107 = por %p105, %p106
      %p108 = scmp.ne.s32.totalorder %s97, %s98
      %p109 = scmp.eq.s32.totalorder %s14, 0
      %p110 = por %p108, %p109
      %p111 = scmp.ne.s32.totalorder %s97, %s98
      %p112 = scmp.eq.s32.totalorder %s15, 5
      %p113 = por %p111, %p112
      %p115 = scmp.ne.s32.totalorder %s98, %s114
      %p116 = scmp.eq.s32.totalorder %s15, 0
      %p117 = por %p115, %p116
      %s118 = ssub.s32 %s16, %s35
      %s119 = ssub.s32 %s17, %s31
      %s120 = sor.u32 %s118, %s119
      %p121 = scmp.eq.s32.totalorder %s120, 0
      %s123 = sadd.s32 %s122, 1
      %s124 = scalar_select %p121, %s122, %s123
      %p127 = pneg %p121
      %p128 = scmp.eq.s32.totalorder %s9, 5
      %p129 = por %p127, %p128
      %p130 = scmp.ne.s32.totalorder %s122, %s125
      %p131 = scmp.eq.s32.totalorder %s9, 0
      %p132 = por %p130, %p131
      %p133 = scmp.ne.s32.totalorder %s122, %s125
      %p134 = scmp.eq.s32.totalorder %s14, 5
      %p135 = por %p133, %p134
      %p136 = scmp.ne.s32.totalorder %s125, %s126
      %p137 = scmp.eq.s32.totalorder %s14, 0
      %p138 = por %p136, %p137
      %p139 = scmp.ne.s32.totalorder %s125, %s126
      %p140 = scmp.eq.s32.totalorder %s15, 5
      %p141 = por %p139, %p140
      %p143 = scmp.ne.s32.totalorder %s126, %s142
      %p144 = scmp.eq.s32.totalorder %s15, 0
      %p145 = por %p143, %p144
      %p146 = scmp.le.s32.totalorder 1, %s9
      %p147 = scmp.lt.s32.totalorder %s9, 7
      %p148 = pnand %p146, %p147
      %p149 = pneg %p148
      // Predicated region
      $region9: #{transformer_encoder_forward.8} parent=5 // pred_check
        _
      $region10: #{transformer_encoder_forward.8} parent=5 // pred_check_branch
        %151 = sbr.rel (%p148) target = $region12
      $region11: #{transformer_encoder_forward.8} parent=5 // pred_region
        %s152 = ssub.s32 %s9, 1
      $region12: #{transformer_encoder_forward.8} parent=5 // pred_fallthru
        _
      %p153 = scmp.lt.s32.totalorder %s9, 6
      // Predicated region
      $region13: #{transformer_encoder_forward.8} parent=5 // pred_check
        %p154 = pneg %p153
      $region14: #{transformer_encoder_forward.8} parent=5 // pred_check_branch
        %156 = sbr.rel (%p154) target = $region16
      $region15: #{transformer_encoder_forward.8} parent=5 // pred_region
        // Predicated region
        $region17: #{transformer_encoder_forward.8} parent=15 // pred_check
          %p157 = pneg %p50
        $region18: #{transformer_encoder_forward.8} parent=15 // pred_check_branch
          %159 = sbr.rel (%p157) target = $region20
        $region19: #{transformer_encoder_forward.8} parent=15 // pred_region
          %s160 = smul.u32 2, %s16
          %p161 = scmp.lt.s32.totalorder %s160, 3
          %s162 = scalar_select %p161, %s160, 3
          %p163 = scmp.lt.s32.totalorder %s18, 0
          %s164 = scalar_select %p163, %s18, 0
          %s165 = sadd.s32 %s164, %s162
          %s166 = smul.addr %s165, 8
          %s167 = scalar_lea.vmem %s0, %s166
          %s168 = smul.u32 2, %s16
        $region20: #{transformer_encoder_forward.8} parent=15 // pred_fallthru
          _
        // Predicated region
        $region21: #{transformer_encoder_forward.8} parent=15 // pred_check
          %p169 = pneg %p78
        $region22: #{transformer_encoder_forward.8} parent=15 // pred_check_branch
          %171 = sbr.rel (%p169) target = $region24
        $region23: #{transformer_encoder_forward.8} parent=15 // pred_region
          %s172 = sand.u32 %s68, 1
          %s173 = sand.u32 %s68, 1
          %s174 = smul.addr %s173, 128
          %s175 = scalar_lea.vmem [#allocation3], %s174
          %s176 = smul.u32 16, %s18
          %s177 = smul.addr %s176, 3
          %s178 = sadd.s32 %s17, %s177
          %s179 = smul.addr %s178, 8
          %s180 = scalar_lea.vmem %s1, %s179
          // Predicated region
          $region25: #{transformer_encoder_forward.8} parent=23 // pred_check
            _
          $region26: #{transformer_encoder_forward.8} parent=23 // pred_check_branch
            %182 = sbr.rel (0) target = $region28
          $region27: #{transformer_encoder_forward.8} parent=23 // pred_region
            // Predicated region
            $region29: #{transformer_encoder_forward.8} parent=27 // pred_check
              _
            $region30: #{transformer_encoder_forward.8} parent=27 // pred_check_branch
              %184 = sbr.rel (0) target = $region32
            $region31: #{transformer_encoder_forward.8} parent=27 // pred_region
              // Predicated region
              $region44: #{transformer_encoder_forward.8} parent=31 // pred_check
                _
              $region45: #{transformer_encoder_forward.8} parent=31 // pred_check_branch
                %229 = sbr.rel (0) target = $region47
              $region46: #{transformer_encoder_forward.8} parent=31 // pred_region
                loop: start=0, step=1, limit=1
                $region48: #{transformer_encoder_forward.8} parent=46 // loop_pre_header
                  _
                $region49: #{transformer_encoder_forward.8} parent=46 // loop_header
                  %s231 = sphi 0, %s235
                  %p232 = scmp.ge.s32.totalorder %s231, 1
                  %s236 = sphi %s180, %s180
                  %s237 = sphi %s175, %s175
                $region50: #{transformer_encoder_forward.8} parent=46 // loop_header_branch
                  %234 = sbr.rel (%p232) target = $region54
                $region51: #{transformer_encoder_forward.8} parent=46 // loop_body
                  %v238 = vld [vmem:[%s236] sm:$0xff]
                  %239 = vst [vmem:[%s237] sm:$0xff] %v238
                  %v240 = vld [vmem:[%s236 + $0x18] sm:$0xff]
                  %241 = vst [vmem:[%s237 + $0x8] sm:$0xff] %v240
                  %v242 = vld [vmem:[%s236 + $0x30] sm:$0xff]
                  %243 = vst [vmem:[%s237 + $0x10] sm:$0xff] %v242
                  %v244 = vld [vmem:[%s236 + $0x48] sm:$0xff]
                  %245 = vst [vmem:[%s237 + $0x18] sm:$0xff] %v244
                  %v246 = vld [vmem:[%s236 + $0x60] sm:$0xff]
                  %247 = vst [vmem:[%s237 + $0x20] sm:$0xff] %v246
                  %v248 = vld [vmem:[%s236 + $0x78] sm:$0xff]
                  %249 = vst [vmem:[%s237 + $0x28] sm:$0xff] %v248
                  %v250 = vld [vmem:[%s236 + $0x90] sm:$0xff]
                  %251 = vst [vmem:[%s237 + $0x30] sm:$0xff] %v250
                  %v252 = vld [vmem:[%s236 + $0xa8] sm:$0xff]
                  %253 = vst [vmem:[%s237 + $0x38] sm:$0xff] %v252
                  %v254 = vld [vmem:[%s236 + $0xc0] sm:$0xff]
                  %255 = vst [vmem:[%s237 + $0x40] sm:$0xff] %v254
                  %v256 = vld [vmem:[%s236 + $0xd8] sm:$0xff]
                  %257 = vst [vmem:[%s237 + $0x48] sm:$0xff] %v256
                  %v258 = vld [vmem:[%s236 + $0xf0] sm:$0xff]
                  %259 = vst [vmem:[%s237 + $0x50] sm:$0xff] %v258
                  %v260 = vld [vmem:[%s236 + $0x108] sm:$0xff]
                  %261 = vst [vmem:[%s237 + $0x58] sm:$0xff] %v260
                  %v262 = vld [vmem:[%s236 + $0x120] sm:$0xff]
                  %263 = vst [vmem:[%s237 + $0x60] sm:$0xff] %v262
                  %v264 = vld [vmem:[%s236 + $0x138] sm:$0xff]
                  %265 = vst [vmem:[%s237 + $0x68] sm:$0xff] %v264
                  %v266 = vld [vmem:[%s236 + $0x150] sm:$0xff]
                  %267 = vst [vmem:[%s237 + $0x70] sm:$0xff] %v266
                  %v268 = vld [vmem:[%s236 + $0x168] sm:$0xff]
                  %269 = vst [vmem:[%s237 + $0x78] sm:$0xff] %v268
                $region52: #{transformer_encoder_forward.8} parent=46 // loop_footer
                  %s235 = sadd.s32 1, %s231
                $region53: #{transformer_encoder_forward.8} parent=46 // loop_footer_branch
                  %230 = sbr.rel target = $region49
                $region54: #{transformer_encoder_forward.8} parent=46 // loop_exit
                  _
              $region47: #{transformer_encoder_forward.8} parent=31 // pred_fallthru
                _
              // Predicated region
              $region55: #{transformer_encoder_forward.8} parent=31 // pred_check
                _
              $region56: #{transformer_encoder_forward.8} parent=31 // pred_check_branch
                %271 = sbr.rel target = $region58
              $region57: #{transformer_encoder_forward.8} parent=31 // pred_region
                _
              $region58: #{transformer_encoder_forward.8} parent=31 // pred_fallthru
                _
            $region32: #{transformer_encoder_forward.8} parent=27 // pred_fallthru
              _
            // Predicated region
            $region33: #{transformer_encoder_forward.8} parent=27 // pred_check
              _
            $region34: #{transformer_encoder_forward.8} parent=27 // pred_check_branch
              %186 = sbr.rel target = $region36
            $region35: #{transformer_encoder_forward.8} parent=27 // pred_region
              loop: start=0, step=1, limit=1
              $region37: #{transformer_encoder_forward.8} parent=35 // loop_pre_header
                _
              $region38: #{transformer_encoder_forward.8} parent=35 // loop_header
                %s189 = sphi 0, %s193
                %p190 = scmp.ge.s32.totalorder %s189, 1
                %s194 = sphi %s180, %s180
                %s195 = sphi %s175, %s175
              $region39: #{transformer_encoder_forward.8} parent=35 // loop_header_branch
                %192 = sbr.rel (%p190) target = $region43
              $region40: #{transformer_encoder_forward.8} parent=35 // loop_body
                %v196 = vld [vmem:[%s194] sm:$0xff]
                %197 = vst [vmem:[%s195] sm:$0xff] %v196
                %v198 = vld [vmem:[%s194 + $0x18] sm:$0xff]
                %199 = vst [vmem:[%s195 + $0x8] sm:$0xff] %v198
                %v200 = vld [vmem:[%s194 + $0x30] sm:$0xff]
                %201 = vst [vmem:[%s195 + $0x10] sm:$0xff] %v200
                %v202 = vld [vmem:[%s194 + $0x48] sm:$0xff]
                %203 = vst [vmem:[%s195 + $0x18] sm:$0xff] %v202
                %v204 = vld [vmem:[%s194 + $0x60] sm:$0xff]
                %205 = vst [vmem:[%s195 + $0x20] sm:$0xff] %v204
                %v206 = vld [vmem:[%s194 + $0x78] sm:$0xff]
                %207 = vst [vmem:[%s195 + $0x28] sm:$0xff] %v206
                %v208 = vld [vmem:[%s194 + $0x90] sm:$0xff]
                %209 = vst [vmem:[%s195 + $0x30] sm:$0xff] %v208
                %v210 = vld [vmem:[%s194 + $0xa8] sm:$0xff]
                %211 = vst [vmem:[%s195 + $0x38] sm:$0xff] %v210
                %v212 = vld [vmem:[%s194 + $0xc0] sm:$0xff]
                %213 = vst [vmem:[%s195 + $0x40] sm:$0xff] %v212
                %v214 = vld [vmem:[%s194 + $0xd8] sm:$0xff]
                %215 = vst [vmem:[%s195 + $0x48] sm:$0xff] %v214
                %v216 = vld [vmem:[%s194 + $0xf0] sm:$0xff]
                %217 = vst [vmem:[%s195 + $0x50] sm:$0xff] %v216
                %v218 = vld [vmem:[%s194 + $0x108] sm:$0xff]
                %219 = vst [vmem:[%s195 + $0x58] sm:$0xff] %v218
                %v220 = vld [vmem:[%s194 + $0x120] sm:$0xff]
                %221 = vst [vmem:[%s195 + $0x60] sm:$0xff] %v220
                %v222 = vld [vmem:[%s194 + $0x138] sm:$0xff]
                %223 = vst [vmem:[%s195 + $0x68] sm:$0xff] %v222
                %v224 = vld [vmem:[%s194 + $0x150] sm:$0xff]
                %225 = vst [vmem:[%s195 + $0x70] sm:$0xff] %v224
                %v226 = vld [vmem:[%s194 + $0x168] sm:$0xff]
                %227 = vst [vmem:[%s195 + $0x78] sm:$0xff] %v226
              $region41: #{transformer_encoder_forward.8} parent=35 // loop_footer
                %s193 = sadd.s32 1, %s189
              $region42: #{transformer_encoder_forward.8} parent=35 // loop_footer_branch
                %188 = sbr.rel target = $region38
              $region43: #{transformer_encoder_forward.8} parent=35 // loop_exit
                _
            $region36: #{transformer_encoder_forward.8} parent=27 // pred_fallthru
              _
          $region28: #{transformer_encoder_forward.8} parent=23 // pred_fallthru
            _
          %272 = vnop
        $region24: #{transformer_encoder_forward.8} parent=15 // pred_fallthru
          _
        // Predicated region
        $region59: #{transformer_encoder_forward.8} parent=15 // pred_check
          %p273 = pneg %p104
        $region60: #{transformer_encoder_forward.8} parent=15 // pred_check_branch
          %275 = sbr.rel (%p273) target = $region62
        $region61: #{transformer_encoder_forward.8} parent=15 // pred_region
          %p276 = scmp.lt.s32.totalorder %s17, 2
          %s277 = scalar_select %p276, %s17, 2
          %s278 = scalar_lea.vmem %s2, %s277
        $region62: #{transformer_encoder_forward.8} parent=15 // pred_fallthru
          _
      $region16: #{transformer_encoder_forward.8} parent=5 // pred_fallthru
        _
      %p279 = scmp.le.s32.totalorder 1, %s9
      %p280 = scmp.lt.s32.totalorder %s9, 7
      %p281 = pnand %p279, %p280
      %p282 = pneg %p281
      // Predicated region
      $region63: #{transformer_encoder_forward.8} parent=5 // pred_check
        _
      $region64: #{transformer_encoder_forward.8} parent=5 // pred_check_branch
        %284 = sbr.rel (%p281) target = $region66
      $region65: #{transformer_encoder_forward.8} parent=5 // pred_region
        %s285 = ssub.s32 %s9, 1
        %s286 = sand.u32 %s71, 1
        %s287 = sand.u32 %s71, 1
        %s288 = smul.addr %s287, 128
        %s289 = scalar_lea.vmem [#allocation3], %s288
        // Predicated region
        $region67: #{transformer_encoder_forward.8} parent=65 // pred_check
          %p290 = pneg %p84
        $region68: #{transformer_encoder_forward.8} parent=65 // pred_check_branch
          %292 = sbr.rel (%p290) target = $region70
        $region69: #{transformer_encoder_forward.8} parent=65 // pred_region
          _
        $region70: #{transformer_encoder_forward.8} parent=65 // pred_fallthru
          _
        %s293 = smul.u32 2, %s19
        %p294 = scmp.lt.s32.totalorder %s293, 3
        %s295 = scalar_select %p294, %s293, 3
        %p296 = scmp.lt.s32.totalorder %s21, 0
        %s297 = scalar_select %p296, %s21, 0
        %s298 = sadd.s32 %s297, %s295
        %s299 = smul.addr %s298, 8
        %s300 = scalar_lea.vmem %s0, %s299
        %p301 = pneg %p56
        %p302 = pneg %p53
        %s303 = sand.u32 %s71, 1
        %s304 = sand.u32 %s71, 1
        %s305 = smul.addr %s304, 128
        %s306 = scalar_lea.vmem [#allocation3], %s305
        %p307 = pneg %p84
        %p308 = pneg %p81
        %p309 = scmp.lt.s32.totalorder %s20, 2
        %s310 = scalar_select %p309, %s20, 2
        %s311 = scalar_lea.vmem %s2, %s310
        %p312 = pneg %p110
        %p313 = pneg %p107
        %p314 = pneg %p138
        %p315 = pneg %p135
        %s316 = sand.u32 %s125, 1
        %s317 = sand.u32 %s125, 1
        %s318 = smul.addr %s317, 16
        %s319 = scalar_lea.vmem [#allocation4], %s318
        %s320 = smul.u32 2, %s19
        %p321 = scmp.lt.s32.totalorder %s320, 3
        %s322 = scalar_select %p321, %s320, 3
        %p323 = scmp.lt.s32.totalorder %s21, 0
        %s324 = scalar_select %p323, %s21, 0
        %s325 = sadd.s32 %s324, %s322
        %s326 = smul.addr %s325, 8
        %s327 = scalar_lea.vmem %s0, %s326
        %s328 = smul.u32 2, %s19
        %s329 = smul.u32 16, %s21
        %p330 = scmp.lt.s32.totalorder %s20, 2
        %s331 = scalar_select %p330, %s20, 2
        %s332 = scalar_lea.vmem %s2, %s331
        %s333 = smul.u32 2, %s19
        %p334 = scmp.eq.s32.totalorder %s21, 0
        // Predicated region
        $region71: #{transformer_encoder_forward.8} parent=65 // pred_check
          %p335 = pneg %p334
        $region72: #{transformer_encoder_forward.8} parent=65 // pred_check_branch
          %337 = sbr.rel (%p335) target = $region74
        $region73: #{transformer_encoder_forward.8} parent=65 // pred_region
          %338 = vst [vmem:[#allocation2] sm:$0xff] 0.0
          %339 = vst [vmem:[#allocation2 + $0x8] sm:$0xff] 0.0
        $region74: #{transformer_encoder_forward.8} parent=65 // pred_fallthru
          _
        %v340 = vld [vmem:[#allocation2] sm:$0xff]
        %v341 = vld [vmem:[#allocation2 + $0x8] sm:$0xff]
        %v342 = vld [vmem:[%s327] sm:$0xff]
        %v343 = vld [vmem:[%s327 + $0x8] sm:$0xff]
        %v344 = vld [vmem:[%s289] sm:$0xff]
        %v345 = vld [vmem:[%s289 + $0x8] sm:$0xff]
        %v346 = vld [vmem:[%s289 + $0x10] sm:$0xff]
        %v347 = vld [vmem:[%s289 + $0x18] sm:$0xff]
        %v348 = vld [vmem:[%s289 + $0x20] sm:$0xff]
        %v349 = vld [vmem:[%s289 + $0x28] sm:$0xff]
        %v350 = vld [vmem:[%s289 + $0x30] sm:$0xff]
        %v351 = vld [vmem:[%s289 + $0x38] sm:$0xff]
        %v352 = vld [vmem:[%s289 + $0x40] sm:$0xff]
        %v353 = vld [vmem:[%s289 + $0x48] sm:$0xff]
        %v354 = vld [vmem:[%s289 + $0x50] sm:$0xff]
        %v355 = vld [vmem:[%s289 + $0x58] sm:$0xff]
        %v356 = vld [vmem:[%s289 + $0x60] sm:$0xff]
        %v357 = vld [vmem:[%s289 + $0x68] sm:$0xff]
        %v358 = vld [vmem:[%s289 + $0x70] sm:$0xff]
        %v359 = vld [vmem:[%s289 + $0x78] sm:$0xff]
        %360 = vmatprep.subr.mxu0 0.0
        %361 = vmatpush1.msra.mxu0 %v344
        %362 = vmatprep.subr.mxu0 0.0
        %363 = vmatpush1.msra.mxu0 %v345
        %364 = vmatprep.subr.mxu0 0.0
        %365 = vmatpush1.msra.mxu0 %v346
        %366 = vmatprep.subr.mxu0 0.0
        %367 = vmatpush1.msra.mxu0 %v347
        %368 = vmatprep.subr.mxu0 0.0
        %369 = vmatpush1.msra.mxu0 %v348
        %370 = vmatprep.subr.mxu0 0.0
        %371 = vmatpush1.msra.mxu0 %v349
        %372 = vmatprep.subr.mxu0 0.0
        %373 = vmatpush1.msra.mxu0 %v350
        %374 = vmatprep.subr.mxu0 0.0
        %375 = vmatpush1.msra.mxu0 %v351
        %376 = vmatprep.subr.mxu0 0.0
        %377 = vmatpush1.msra.mxu0 %v352
        %378 = vmatprep.subr.mxu0 0.0
        %379 = vmatpush1.msra.mxu0 %v353
        %380 = vmatprep.subr.mxu0 0.0
        %381 = vmatpush1.msra.mxu0 %v354
        %382 = vmatprep.subr.mxu0 0.0
        %383 = vmatpush1.msra.mxu0 %v355
        %384 = vmatprep.subr.mxu0 0.0
        %385 = vmatpush1.msra.mxu0 %v356
        %386 = vmatprep.subr.mxu0 0.0
        %387 = vmatpush1.msra.mxu0 %v357
        %388 = vmatprep.subr.mxu0 0.0
        %389 = vmatpush1.msra.mxu0 %v358
        %390 = vmatprep.subr.mxu0 0.0
        %391 = vmatpush1.msra.mxu0 %v359
        %392 = vmatprep.subr.mxu0 0.0
        %393 = vmatpush1.msra.mxu0 0.0
        %394 = vmatprep.subr.mxu0 0.0
        %395 = vmatpush1.msra.mxu0 0.0
        %396 = vmatprep.subr.mxu0 0.0
        %397 = vmatpush1.msra.mxu0 0.0
        %398 = vmatprep.subr.mxu0 0.0
        %399 = vmatpush1.msra.mxu0 0.0
        %400 = vmatprep.subr.mxu0 0.0
        %401 = vmatpush1.msra.mxu0 0.0
        %402 = vmatprep.subr.mxu0 0.0
        %403 = vmatpush1.msra.mxu0 0.0
        %404 = vmatprep.subr.mxu0 0.0
        %405 = vmatpush1.msra.mxu0 0.0
        %406 = vmatprep.subr.mxu0 0.0
        %407 = vmatpush1.msra.mxu0 0.0
        %408 = vmatprep.subr.mxu0 0.0
        %409 = vmatpush1.msra.mxu0 0.0
        %410 = vmatprep.subr.mxu0 0.0
        %411 = vmatpush1.msra.mxu0 0.0
        %412 = vmatprep.subr.mxu0 0.0
        %413 = vmatpush1.msra.mxu0 0.0
        %414 = vmatprep.subr.mxu0 0.0
        %415 = vmatpush1.msra.mxu0 0.0
        %416 = vmatprep.subr.mxu0 0.0
        %417 = vmatpush1.msra.mxu0 0.0
        %418 = vmatprep.subr.mxu0 0.0
        %419 = vmatpush1.msra.mxu0 0.0
        %420 = vmatprep.subr.mxu0 0.0
        %421 = vmatpush1.msra.mxu0 0.0
        %422 = vmatprep.subr.mxu0 0.0
        %423 = vmatpush1.msra.mxu0 0.0
        %424 = vmatprep.mubr.f32.mxu0 0.0
        %425 = vmatmul.mubr.f32.gmra.mrb[0].mxu0 %v342
        %v426 = vpop.f32.mrb[0].mxu0
        %v427 = vadd.f32 0.0, %v426
        %v428 = vpop.f32.mrb[0].mxu0
        %429 = vmatprep.mubr.f32.mxu0 0.0
        %430 = vmatmul.mubr.f32.gmra.mrb[0].mxu0 %v343
        %v431 = vpop.f32.mrb[0].mxu0
        %v432 = vadd.f32 0.0, %v431
        %v433 = vpop.f32.mrb[0].mxu0
        %434 = vdwg.mxu0
        %v435 = vadd.f32 %v340, %v427
        %v436 = vadd.f32 %v341, %v432
        %437 = vst [vmem:[#allocation2] sm:$0xff] %v435
        %438 = vst [vmem:[#allocation2 + $0x8] sm:$0xff] %v436
        // Predicated region
        $region75: #{transformer_encoder_forward.8} parent=65 // pred_check
          %p439 = pneg %p334
        $region76: #{transformer_encoder_forward.8} parent=65 // pred_check_branch
          %441 = sbr.rel (%p439) target = $region78
        $region77: #{transformer_encoder_forward.8} parent=65 // pred_region
          %v442 = vld [vmem:[#allocation2] sm:$0xff]
          %v443 = vld [vmem:[#allocation2 + $0x8] sm:$0xff]
          %v444 = vld [vmem:[%s332] sm:$0x1]
          %v446 = vlaneseq
          %v447 = vshrl.u32 %v446, 7
          %v448 = vsub.s32 0, %v447
          %v449 = vrot.slane %v444, %v448
          %v451 = vadd.f32 %v442, %v449
          %v452 = vadd.f32 %v443, %v449
          %453 = vst [vmem:[%s319] sm:$0xff] %v451
          %454 = vst [vmem:[%s319 + $0x8] sm:$0xff] %v452
        $region78: #{transformer_encoder_forward.8} parent=65 // pred_fallthru
          _
        %s455 = sand.u32 %s125, 1
        %s456 = sand.u32 %s125, 1
        %s457 = smul.addr %s456, 16
        %s458 = scalar_lea.vmem [#allocation4], %s457
        // Predicated region
        $region79: #{transformer_encoder_forward.8} parent=65 // pred_check
          %p459 = pneg %p135
        $region80: #{transformer_encoder_forward.8} parent=65 // pred_check_branch
          %461 = sbr.rel (%p459) target = $region82
        $region81: #{transformer_encoder_forward.8} parent=65 // pred_region
          %s462 = smul.u32 2, %s19
          %s463 = smul.addr %s462, 3
          %s464 = sadd.s32 %s20, %s463
          %s465 = smul.addr %s464, 8
          %s466 = scalar_lea.vmem %s3, %s465
          // Predicated region
          $region83: #{transformer_encoder_forward.8} parent=81 // pred_check
            _
          $region84: #{transformer_encoder_forward.8} parent=81 // pred_check_branch
            %468 = sbr.rel (0) target = $region86
          $region85: #{transformer_encoder_forward.8} parent=81 // pred_region
            // Predicated region
            $region87: #{transformer_encoder_forward.8} parent=85 // pred_check
              _
            $region88: #{transformer_encoder_forward.8} parent=85 // pred_check_branch
              %470 = sbr.rel (0) target = $region90
            $region89: #{transformer_encoder_forward.8} parent=85 // pred_region
              // Predicated region
              $region102: #{transformer_encoder_forward.8} parent=89 // pred_check
                _
              $region103: #{transformer_encoder_forward.8} parent=89 // pred_check_branch
                %487 = sbr.rel (0) target = $region105
              $region104: #{transformer_encoder_forward.8} parent=89 // pred_region
                loop: start=0, step=1, limit=1
                $region106: #{transformer_encoder_forward.8} parent=104 // loop_pre_header
                  _
                $region107: #{transformer_encoder_forward.8} parent=104 // loop_header
                  %s489 = sphi 0, %s493
                  %p490 = scmp.ge.s32.totalorder %s489, 1
                  %s494 = sphi %s458, %s458
                  %s495 = sphi %s466, %s466
                $region108: #{transformer_encoder_forward.8} parent=104 // loop_header_branch
                  %492 = sbr.rel (%p490) target = $region112
                $region109: #{transformer_encoder_forward.8} parent=104 // loop_body
                  %v496 = vld [vmem:[%s494] sm:$0xff]
                  %497 = vst [vmem:[%s495] sm:$0xff] %v496
                  %v498 = vld [vmem:[%s494 + $0x8] sm:$0xff]
                  %499 = vst [vmem:[%s495 + $0x18] sm:$0xff] %v498
                $region110: #{transformer_encoder_forward.8} parent=104 // loop_footer
                  %s493 = sadd.s32 1, %s489
                $region111: #{transformer_encoder_forward.8} parent=104 // loop_footer_branch
                  %488 = sbr.rel target = $region107
                $region112: #{transformer_encoder_forward.8} parent=104 // loop_exit
                  _
              $region105: #{transformer_encoder_forward.8} parent=89 // pred_fallthru
                _
              // Predicated region
              $region113: #{transformer_encoder_forward.8} parent=89 // pred_check
                _
              $region114: #{transformer_encoder_forward.8} parent=89 // pred_check_branch
                %501 = sbr.rel target = $region116
              $region115: #{transformer_encoder_forward.8} parent=89 // pred_region
                _
              $region116: #{transformer_encoder_forward.8} parent=89 // pred_fallthru
                _
            $region90: #{transformer_encoder_forward.8} parent=85 // pred_fallthru
              _
            // Predicated region
            $region91: #{transformer_encoder_forward.8} parent=85 // pred_check
              _
            $region92: #{transformer_encoder_forward.8} parent=85 // pred_check_branch
              %472 = sbr.rel target = $region94
            $region93: #{transformer_encoder_forward.8} parent=85 // pred_region
              loop: start=0, step=1, limit=1
              $region95: #{transformer_encoder_forward.8} parent=93 // loop_pre_header
                _
              $region96: #{transformer_encoder_forward.8} parent=93 // loop_header
                %s475 = sphi 0, %s479
                %p476 = scmp.ge.s32.totalorder %s475, 1
                %s480 = sphi %s458, %s458
                %s481 = sphi %s466, %s466
              $region97: #{transformer_encoder_forward.8} parent=93 // loop_header_branch
                %478 = sbr.rel (%p476) target = $region101
              $region98: #{transformer_encoder_forward.8} parent=93 // loop_body
                %v482 = vld [vmem:[%s480] sm:$0xff]
                %483 = vst [vmem:[%s481] sm:$0xff] %v482
                %v484 = vld [vmem:[%s480 + $0x8] sm:$0xff]
                %485 = vst [vmem:[%s481 + $0x18] sm:$0xff] %v484
              $region99: #{transformer_encoder_forward.8} parent=93 // loop_footer
                %s479 = sadd.s32 1, %s475
              $region100: #{transformer_encoder_forward.8} parent=93 // loop_footer_branch
                %474 = sbr.rel target = $region96
              $region101: #{transformer_encoder_forward.8} parent=93 // loop_exit
                _
            $region94: #{transformer_encoder_forward.8} parent=85 // pred_fallthru
              _
          $region86: #{transformer_encoder_forward.8} parent=81 // pred_fallthru
            _
          %502 = vnop
        $region82: #{transformer_encoder_forward.8} parent=65 // pred_fallthru
          _
      $region66: #{transformer_encoder_forward.8} parent=5 // pred_fallthru
        _
      %p503 = scmp.le.s32.totalorder 2, %s9
      // Predicated region
      $region117: #{transformer_encoder_forward.8} parent=5 // pred_check
        %p504 = pneg %p503
      $region118: #{transformer_encoder_forward.8} parent=5 // pred_check_branch
        %506 = sbr.rel (%p504) target = $region120
      $region119: #{transformer_encoder_forward.8} parent=5 // pred_region
        %s507 = ssub.s32 %s9, 2
        // Predicated region
        $region121: #{transformer_encoder_forward.8} parent=119 // pred_check
          %p508 = pneg %p141
        $region122: #{transformer_encoder_forward.8} parent=119 // pred_check_branch
          %510 = sbr.rel (%p508) target = $region124
        $region123: #{transformer_encoder_forward.8} parent=119 // pred_region
          %s511 = sand.u32 %s126, 1
          %s512 = sand.u32 %s126, 1
          %s513 = smul.addr %s512, 16
          %s514 = scalar_lea.vmem [#allocation4], %s513
        $region124: #{transformer_encoder_forward.8} parent=119 // pred_fallthru
          _
      $region120: #{transformer_encoder_forward.8} parent=5 // pred_fallthru
        _
    $region6: #{transformer_encoder_forward.8} parent=1 // loop_footer
      %s13 = sadd.s32 1, %s9
    $region7: #{transformer_encoder_forward.8} parent=1 // loop_footer_branch
      %8 = sbr.rel target = $region3
    $region8: #{transformer_encoder_forward.8} parent=1 // loop_exit
      _

// kernel: transformer_encoder_forward.10
$region0: #{transformer_encoder_forward.10}
  #allocation0 [shape = 'u32[]', space=smem, size = 0x4, offset = 0x4, fixed_abs, tag = 'smem constant byte address 0x4 - core index']
  #allocation1 [shape = 'u32[144,128]{1,0:T(1,128)}', space=vmem, size = 0x12000, scoped, tag = 'internal scratch']
  #allocation2 [shape = 'f32[16,128]{1,0:T(8,128)}', space=vmem, size = 0x2000, scoped, tag = 'scratch operand']
  %s0 = inlined_call_operand.vmem [shape: f32[32,128], index: 0, kind: input, shape index: {}, may-alias: {0,3}]
  %s1 = inlined_call_operand.vmem [shape: f32[128,128], index: 1, kind: input, shape index: {}]
  %s2 = inlined_call_operand.vmem [shape: f32[1,128], index: 2, kind: input, shape index: {}]
  %s3 = inlined_call_operand.vmem [shape: f32[32,128], index: 3, kind: input, shape index: {}, may-alias: {0,3}]
  %s4 = inlined_call_operand.vmem [shape: f32[1,128], index: 4, kind: input, shape index: {}]
  %s5 = inlined_call_operand.vmem [shape: f32[1,128], index: 5, kind: input, shape index: {}]
  %s6 = inlined_call_operand.vmem [shape: f32[32,128], index: 6, kind: output, shape index: {}]
  %s7 = sld [smem:[#allocation0]]
  $region65: #{transformer_encoder_forward.10} parent=0
    _
  %s9 = ssub.s32 1, %s7
  %s10 = scalar_select 0, %s9, %s7
  loop: start=0, step=1, limit=4
  $region2: #{transformer_encoder_forward.10} parent=0 // loop_pre_header
    _
  $region3: #{transformer_encoder_forward.10} parent=0 // loop_header
    %s12 = sphi 0, %s16
    %p13 = scmp.ge.s32.totalorder %s12, 4
    %s19 = sphi 0, %s31
    %s20 = sphi 0, %s27
    %s21 = sphi 0, %s19
    %s22 = sphi 0, %s20
    %s23 = sphi 0, %s21
    %s24 = sphi 0, %s22
    %s36 = sphi 0, %s38
    %s39 = sphi 0, %s36
    %s40 = sphi 0, %s39
    %s56 = sphi 0, %s40
    %s62 = sphi 0, %s64
    %s65 = sphi 0, %s62
    %s66 = sphi 0, %s65
    %s82 = sphi 0, %s66
    %s86 = sphi 0, %s86
    %s88 = sphi 0, %s86
    %s89 = sphi 0, %s88
    %s103 = sphi 0, %s89
    %s109 = sphi 0, %s111
    %s112 = sphi 0, %s109
    %s113 = sphi 0, %s112
    %s129 = sphi 0, %s113
    %s133 = sphi 0, %s133
    %s135 = sphi 0, %s133
    %s136 = sphi 0, %s135
    %s150 = sphi 0, %s136
    %s154 = sphi 0, %s154
    %s156 = sphi 0, %s154
    %s157 = sphi 0, %s156
    %s171 = sphi 0, %s157
    %s177 = sphi 0, %s179
    %s180 = sphi 0, %s177
    %s181 = sphi 0, %s180
    %s197 = sphi 0, %s181
  $region4: #{transformer_encoder_forward.10} parent=0 // loop_header_branch
    %15 = sbr.rel (%p13) target = $region8
  $region5: #{transformer_encoder_forward.10} parent=0 // loop_body
    %s17 = ssub.s32 %s12, 1
    %s18 = ssub.s32 %s12, 2
    %s25 = sadd.s32 1, %s20
    %p26 = scmp.ge.s32.totalorder %s25, 1
    %s27 = scalar_select %p26, 0, %s25
    %s28 = sadd.s32 1, %s19
    %s29 = scalar_select %p26, %s28, %s19
    %p30 = scmp.ge.s32.totalorder %s29, 2
    %s31 = scalar_select %p30, 0, %s29
    %s32 = ssub.s32 %s19, %s31
    %s33 = ssub.s32 %s20, %s27
    %s34 = sor.u32 %s32, %s33
    %p35 = scmp.eq.s32.totalorder %s34, 0
    %s37 = sadd.s32 %s36, 1
    %s38 = scalar_select %p35, %s36, %s37
    %p41 = pneg %p35
    %p42 = scmp.eq.s32.totalorder %s12, 1
    %p43 = por %p41, %p42
    %p44 = scmp.ne.s32.totalorder %s36, %s39
    %p45 = scmp.eq.s32.totalorder %s12, 0
    %p46 = por %p44, %p45
    %p47 = scmp.ne.s32.totalorder %s36, %s39
    %p48 = scmp.eq.s32.totalorder %s17, 1
    %p49 = por %p47, %p48
    %p50 = scmp.ne.s32.totalorder %s39, %s40
    %p51 = scmp.eq.s32.totalorder %s17, 0
    %p52 = por %p50, %p51
    %p53 = scmp.ne.s32.totalorder %s39, %s40
    %p54 = scmp.eq.s32.totalorder %s18, 1
    %p55 = por %p53, %p54
    %p57 = scmp.ne.s32.totalorder %s40, %s56
    %p58 = scmp.eq.s32.totalorder %s18, 0
    %p59 = por %p57, %p58
    %s60 = ssub.s32 %s20, %s27
    %p61 = scmp.eq.s32.totalorder %s60, 0
    %s63 = sadd.s32 %s62, 1
    %s64 = scalar_select %p61, %s62, %s63
    %p67 = pneg %p61
    %p68 = scmp.eq.s32.totalorder %s12, 1
    %p69 = por %p67, %p68
    %p70 = scmp.ne.s32.totalorder %s62, %s65
    %p71 = scmp.eq.s32.totalorder %s12, 0
    %p72 = por %p70, %p71
    %p73 = scmp.ne.s32.totalorder %s62, %s65
    %p74 = scmp.eq.s32.totalorder %s17, 1
    %p75 = por %p73, %p74
    %p76 = scmp.ne.s32.totalorder %s65, %s66
    %p77 = scmp.eq.s32.totalorder %s17, 0
    %p78 = por %p76, %p77
    %p79 = scmp.ne.s32.totalorder %s65, %s66
    %p80 = scmp.eq.s32.totalorder %s18, 1
    %p81 = por %p79, %p80
    %p83 = scmp.ne.s32.totalorder %s66, %s82
    %p84 = scmp.eq.s32.totalorder %s18, 0
    %p85 = por %p83, %p84
    %s87 = sadd.s32 %s86, 1
    %p90 = scmp.eq.s32.totalorder %s12, 1
    %p91 = scmp.ne.s32.totalorder %s86, %s88
    %p92 = scmp.eq.s32.totalorder %s12, 0
    %p93 = por %p91, %p92
    %p94 = scmp.ne.s32.totalorder %s86, %s88
    %p95 = scmp.eq.s32.totalorder %s17, 1
    %p96 = por %p94, %p95
    %p97 = scmp.ne.s32.totalorder %s88, %s89
    %p98 = scmp.eq.s32.totalorder %s17, 0
    %p99 = por %p97, %p98
    %p100 = scmp.ne.s32.totalorder %s88, %s89
    %p101 = scmp.eq.s32.totalorder %s18, 1
    %p102 = por %p100, %p101
    %p104 = scmp.ne.s32.totalorder %s89, %s103
    %p105 = scmp.eq.s32.totalorder %s18, 0
    %p106 = por %p104, %p105
    %s107 = ssub.s32 %s19, %s31
    %p108 = scmp.eq.s32.totalorder %s107, 0
    %s110 = sadd.s32 %s109, 1
    %s111 = scalar_select %p108, %s109, %s110
    %p114 = pneg %p108
    %p115 = scmp.eq.s32.totalorder %s12, 1
    %p116 = por %p114, %p115
    %p117 = scmp.ne.s32.totalorder %s109, %s112
    %p118 = scmp.eq.s32.totalorder %s12, 0
    %p119 = por %p117, %p118
    %p120 = scmp.ne.s32.totalorder %s109, %s112
    %p121 = scmp.eq.s32.totalorder %s17, 1
    %p122 = por %p120, %p121
    %p123 = scmp.ne.s32.totalorder %s112, %s113
    %p124 = scmp.eq.s32.totalorder %s17, 0
    %p125 = por %p123, %p124
    %p126 = scmp.ne.s32.totalorder %s112, %s113
    %p127 = scmp.eq.s32.totalorder %s18, 1
    %p128 = por %p126, %p127
    %p130 = scmp.ne.s32.totalorder %s113, %s129
    %p131 = scmp.eq.s32.totalorder %s18, 0
    %p132 = por %p130, %p131
    %s134 = sadd.s32 %s133, 1
    %p137 = scmp.eq.s32.totalorder %s12, 1
    %p138 = scmp.ne.s32.totalorder %s133, %s135
    %p139 = scmp.eq.s32.totalorder %s12, 0
    %p140 = por %p138, %p139
    %p141 = scmp.ne.s32.totalorder %s133, %s135
    %p142 = scmp.eq.s32.totalorder %s17, 1
    %p143 = por %p141, %p142
    %p144 = scmp.ne.s32.totalorder %s135, %s136
    %p145 = scmp.eq.s32.totalorder %s17, 0
    %p146 = por %p144, %p145
    %p147 = scmp.ne.s32.totalorder %s135, %s136
    %p148 = scmp.eq.s32.totalorder %s18, 1
    %p149 = por %p147, %p148
    %p151 = scmp.ne.s32.totalorder %s136, %s150
    %p152 = scmp.eq.s32.totalorder %s18, 0
    %p153 = por %p151, %p152
    %s155 = sadd.s32 %s154, 1
    %p158 = scmp.eq.s32.totalorder %s12, 1
    %p159 = scmp.ne.s32.totalorder %s154, %s156
    %p160 = scmp.eq.s32.totalorder %s12, 0
    %p161 = por %p159, %p160
    %p162 = scmp.ne.s32.totalorder %s154, %s156
    %p163 = scmp.eq.s32.totalorder %s17, 1
    %p164 = por %p162, %p163
    %p165 = scmp.ne.s32.totalorder %s156, %s157
    %p166 = scmp.eq.s32.totalorder %s17, 0
    %p167 = por %p165, %p166
    %p168 = scmp.ne.s32.totalorder %s156, %s157
    %p169 = scmp.eq.s32.totalorder %s18, 1
    %p170 = por %p168, %p169
    %p172 = scmp.ne.s32.totalorder %s157, %s171
    %p173 = scmp.eq.s32.totalorder %s18, 0
    %p174 = por %p172, %p173
    %s175 = ssub.s32 %s19, %s31
    %p176 = scmp.eq.s32.totalorder %s175, 0
    %s178 = sadd.s32 %s177, 1
    %s179 = scalar_select %p176, %s177, %s178
    %p182 = pneg %p176
    %p183 = scmp.eq.s32.totalorder %s12, 1
    %p184 = por %p182, %p183
    %p185 = scmp.ne.s32.totalorder %s177, %s180
    %p186 = scmp.eq.s32.totalorder %s12, 0
    %p187 = por %p185, %p186
    %p188 = scmp.ne.s32.totalorder %s177, %s180
    %p189 = scmp.eq.s32.totalorder %s17, 1
    %p190 = por %p188, %p189
    %p191 = scmp.ne.s32.totalorder %s180, %s181
    %p192 = scmp.eq.s32.totalorder %s17, 0
    %p193 = por %p191, %p192
    %p194 = scmp.ne.s32.totalorder %s180, %s181
    %p195 = scmp.eq.s32.totalorder %s18, 1
    %p196 = por %p194, %p195
    %p198 = scmp.ne.s32.totalorder %s181, %s197
    %p199 = scmp.eq.s32.totalorder %s18, 0
    %p200 = por %p198, %p199
    %p201 = scmp.le.s32.totalorder 1, %s12
    %p202 = scmp.lt.s32.totalorder %s12, 3
    %p203 = pnand %p201, %p202
    %p204 = pneg %p203
    // Predicated region
    $region9: #{transformer_encoder_forward.10} parent=5 // pred_check
      _
    $region10: #{transformer_encoder_forward.10} parent=5 // pred_check_branch
      %206 = sbr.rel (%p203) target = $region12
    $region11: #{transformer_encoder_forward.10} parent=5 // pred_region
      %s207 = ssub.s32 %s12, 1
      // Predicated region
      $region13: #{transformer_encoder_forward.10} parent=11 // pred_check
        %p208 = pneg %p78
      $region14: #{transformer_encoder_forward.10} parent=11 // pred_check_branch
        %210 = sbr.rel (%p208) target = $region16
      $region15: #{transformer_encoder_forward.10} parent=11 // pred_region
        %s211 = smul.u32 16, %s22
        %p212 = scmp.lt.s32.totalorder %s211, 15
        %s213 = scalar_select %p212, %s211, 15
        %s214 = smul.addr %s213, 8
        %s215 = scalar_lea.vmem %s1, %s214
        %s216 = smul.u32 16, %s22
      $region16: #{transformer_encoder_forward.10} parent=11 // pred_fallthru
        _
      // Predicated region
      $region17: #{transformer_encoder_forward.10} parent=11 // pred_check
        %p217 = pneg %p99
      $region18: #{transformer_encoder_forward.10} parent=11 // pred_check_branch
        %219 = sbr.rel (%p217) target = $region20
      $region19: #{transformer_encoder_forward.10} parent=11 // pred_region
        _
      $region20: #{transformer_encoder_forward.10} parent=11 // pred_fallthru
        _
      // Predicated region
      $region21: #{transformer_encoder_forward.10} parent=11 // pred_check
        %p220 = pneg %p146
      $region22: #{transformer_encoder_forward.10} parent=11 // pred_check_branch
        %222 = sbr.rel (%p220) target = $region24
      $region23: #{transformer_encoder_forward.10} parent=11 // pred_region
        _
      $region24: #{transformer_encoder_forward.10} parent=11 // pred_fallthru
        _
      // Predicated region
      $region25: #{transformer_encoder_forward.10} parent=11 // pred_check
        %p223 = pneg %p167
      $region26: #{transformer_encoder_forward.10} parent=11 // pred_check_branch
        %225 = sbr.rel (%p223) target = $region28
      $region27: #{transformer_encoder_forward.10} parent=11 // pred_region
        _
      $region28: #{transformer_encoder_forward.10} parent=11 // pred_fallthru
        _
    $region12: #{transformer_encoder_forward.10} parent=5 // pred_fallthru
      _
    %p226 = scmp.lt.s32.totalorder %s12, 2
    // Predicated region
    $region29: #{transformer_encoder_forward.10} parent=5 // pred_check
      %p227 = pneg %p226
    $region30: #{transformer_encoder_forward.10} parent=5 // pred_check_branch
      %229 = sbr.rel (%p227) target = $region32
    $region31: #{transformer_encoder_forward.10} parent=5 // pred_region
      // Predicated region
      $region33: #{transformer_encoder_forward.10} parent=31 // pred_check
        %p230 = pneg %p46
      $region34: #{transformer_encoder_forward.10} parent=31 // pred_check_branch
        %232 = sbr.rel (%p230) target = $region36
      $region35: #{transformer_encoder_forward.10} parent=31 // pred_region
        %s233 = smul.u32 2, %s19
        %p234 = scmp.lt.s32.totalorder %s233, 3
        %s235 = scalar_select %p234, %s233, 3
        %p236 = scmp.lt.s32.totalorder %s20, 0
        %s237 = scalar_select %p236, %s20, 0
        %s238 = sadd.s32 %s237, %s235
        %s239 = smul.addr %s238, 8
        %s240 = scalar_lea.vmem %s0, %s239
        %s241 = smul.u32 2, %s19
      $region36: #{transformer_encoder_forward.10} parent=31 // pred_fallthru
        _
      // Predicated region
      $region37: #{transformer_encoder_forward.10} parent=31 // pred_check
        %p242 = pneg %p119
      $region38: #{transformer_encoder_forward.10} parent=31 // pred_check_branch
        %244 = sbr.rel (%p242) target = $region40
      $region39: #{transformer_encoder_forward.10} parent=31 // pred_region
        %s245 = smul.u32 2, %s19
        %p246 = scmp.lt.s32.totalorder %s245, 3
        %s247 = scalar_select %p246, %s245, 3
        %s248 = smul.addr %s247, 8
        %s249 = scalar_lea.vmem %s3, %s248
        %s250 = smul.u32 2, %s19
      $region40: #{transformer_encoder_forward.10} parent=31 // pred_fallthru
        _
    $region32: #{transformer_encoder_forward.10} parent=5 // pred_fallthru
      _
    %p251 = scmp.le.s32.totalorder 1, %s12
    %p252 = scmp.lt.s32.totalorder %s12, 3
    %p253 = pnand %p251, %p252
    %p254 = pneg %p253
    // Predicated region
    $region41: #{transformer_encoder_forward.10} parent=5 // pred_check
      _
    $region42: #{transformer_encoder_forward.10} parent=5 // pred_check_branch
      %256 = sbr.rel (%p253) target = $region44
    $region43: #{transformer_encoder_forward.10} parent=5 // pred_region
      %s257 = ssub.s32 %s12, 1
      %s258 = smul.u32 2, %s21
      %p259 = scmp.lt.s32.totalorder %s258, 3
      %s260 = scalar_select %p259, %s258, 3
      %p261 = scmp.lt.s32.totalorder %s22, 0
      %s262 = scalar_select %p261, %s22, 0
      %s263 = sadd.s32 %s262, %s260
      %s264 = smul.addr %s263, 8
      %s265 = scalar_lea.vmem %s0, %s264
      %p266 = pneg %p52
      %p267 = pneg %p49
      %s268 = smul.u32 16, %s22
      %p269 = scmp.lt.s32.totalorder %s268, 15
      %s270 = scalar_select %p269, %s268, 15
      %s271 = smul.addr %s270, 8
      %s272 = scalar_lea.vmem %s1, %s271
      %p273 = pneg %p78
      %p274 = pneg %p75
      %p275 = pneg %p99
      %p276 = pneg %p96
      %s277 = smul.u32 2, %s21
      %p278 = scmp.lt.s32.totalorder %s277, 3
      %s279 = scalar_select %p278, %s277, 3
      %s280 = smul.addr %s279, 8
      %s281 = scalar_lea.vmem %s3, %s280
      %p282 = pneg %p125
      %p283 = pneg %p122
      %p284 = pneg %p146
      %p285 = pneg %p143
      %p286 = pneg %p167
      %p287 = pneg %p164
      %p288 = pneg %p193
      %p289 = pneg %p190
      %s290 = smul.u32 2, %s21
      %p291 = scmp.lt.s32.totalorder %s290, 3
      %s292 = scalar_select %p291, %s290, 3
      %s293 = smul.addr %s292, 8
      %s294 = scalar_lea.vmem %s6, %s293
      %s295 = smul.u32 2, %s21
      %p296 = scmp.lt.s32.totalorder %s295, 3
      %s297 = scalar_select %p296, %s295, 3
      %p298 = scmp.lt.s32.totalorder %s22, 0
      %s299 = scalar_select %p298, %s22, 0
      %s300 = sadd.s32 %s299, %s297
      %s301 = smul.addr %s300, 8
      %s302 = scalar_lea.vmem %s0, %s301
      %s303 = smul.u32 2, %s21
      %s304 = smul.u32 16, %s22
      %p305 = scmp.lt.s32.totalorder %s304, 15
      %s306 = scalar_select %p305, %s304, 15
      %s307 = smul.addr %s306, 8
      %s308 = scalar_lea.vmem %s1, %s307
      %s309 = smul.u32 16, %s22
      %s310 = smul.u32 2, %s21
      %p311 = scmp.lt.s32.totalorder %s310, 3
      %s312 = scalar_select %p311, %s310, 3
      %s313 = smul.addr %s312, 8
      %s314 = scalar_lea.vmem %s3, %s313
      %s315 = smul.u32 2, %s21
      %s316 = smul.u32 2, %s21
      %p317 = scmp.lt.s32.totalorder %s316, 3
      %s318 = scalar_select %p317, %s316, 3
      %s319 = smul.addr %s318, 8
      %s320 = scalar_lea.vmem %s6, %s319
      %s321 = smul.u32 2, %s21
      %p322 = scmp.eq.s32.totalorder %s22, 0
      // Predicated region
      $region45: #{transformer_encoder_forward.10} parent=43 // pred_check
        %p323 = pneg %p322
      $region46: #{transformer_encoder_forward.10} parent=43 // pred_check_branch
        %325 = sbr.rel (%p323) target = $region48
      $region47: #{transformer_encoder_forward.10} parent=43 // pred_region
        %326 = vst [vmem:[#allocation2] sm:$0xff] 0.0
        %327 = vst [vmem:[#allocation2 + $0x8] sm:$0xff] 0.0
      $region48: #{transformer_encoder_forward.10} parent=43 // pred_fallthru
        _
      %v328 = vld [vmem:[#allocation2] sm:$0xff]
      %v329 = vld [vmem:[#allocation2 + $0x8] sm:$0xff]
      %v330 = vld [vmem:[%s302] sm:$0xff]
      %v331 = vld [vmem:[%s302 + $0x8] sm:$0xff]
      %v332 = vld [vmem:[%s308] sm:$0xff]
      %v333 = vld [vmem:[%s308 + $0x8] sm:$0xff]
      %v334 = vld [vmem:[%s308 + $0x10] sm:$0xff]
      %v335 = vld [vmem:[%s308 + $0x18] sm:$0xff]
      %v336 = vld [vmem:[%s308 + $0x20] sm:$0xff]
      %v337 = vld [vmem:[%s308 + $0x28] sm:$0xff]
      %v338 = vld [vmem:[%s308 + $0x30] sm:$0xff]
      %v339 = vld [vmem:[%s308 + $0x38] sm:$0xff]
      %v340 = vld [vmem:[%s308 + $0x40] sm:$0xff]
      %v341 = vld [vmem:[%s308 + $0x48] sm:$0xff]
      %v342 = vld [vmem:[%s308 + $0x50] sm:$0xff]
      %v343 = vld [vmem:[%s308 + $0x58] sm:$0xff]
      %v344 = vld [vmem:[%s308 + $0x60] sm:$0xff]
      %v345 = vld [vmem:[%s308 + $0x68] sm:$0xff]
      %v346 = vld [vmem:[%s308 + $0x70] sm:$0xff]
      %v347 = vld [vmem:[%s308 + $0x78] sm:$0xff]
      %348 = vmatprep.subr.mxu0 0.0
      %349 = vmatpush1.msra.mxu0 %v332
      %350 = vmatprep.subr.mxu0 0.0
      %351 = vmatpush1.msra.mxu0 %v333
      %352 = vmatprep.subr.mxu0 0.0
      %353 = vmatpush1.msra.mxu0 %v334
      %354 = vmatprep.subr.mxu0 0.0
      %355 = vmatpush1.msra.mxu0 %v335
      %356 = vmatprep.subr.mxu0 0.0
      %357 = vmatpush1.msra.mxu0 %v336
      %358 = vmatprep.subr.mxu0 0.0
      %359 = vmatpush1.msra.mxu0 %v337
      %360 = vmatprep.subr.mxu0 0.0
      %361 = vmatpush1.msra.mxu0 %v338
      %362 = vmatprep.subr.mxu0 0.0
      %363 = vmatpush1.msra.mxu0 %v339
      %364 = vmatprep.subr.mxu0 0.0
      %365 = vmatpush1.msra.mxu0 %v340
      %366 = vmatprep.subr.mxu0 0.0
      %367 = vmatpush1.msra.mxu0 %v341
      %368 = vmatprep.subr.mxu0 0.0
      %369 = vmatpush1.msra.mxu0 %v342
      %370 = vmatprep.subr.mxu0 0.0
      %371 = vmatpush1.msra.mxu0 %v343
      %372 = vmatprep.subr.mxu0 0.0
      %373 = vmatpush1.msra.mxu0 %v344
      %374 = vmatprep.subr.mxu0 0.0
      %375 = vmatpush1.msra.mxu0 %v345
      %376 = vmatprep.subr.mxu0 0.0
      %377 = vmatpush1.msra.mxu0 %v346
      %378 = vmatprep.subr.mxu0 0.0
      %379 = vmatpush1.msra.mxu0 %v347
      %380 = vmatprep.subr.mxu0 0.0
      %381 = vmatpush1.msra.mxu0 0.0
      %382 = vmatprep.subr.mxu0 0.0
      %383 = vmatpush1.msra.mxu0 0.0
      %384 = vmatprep.subr.mxu0 0.0
      %385 = vmatpush1.msra.mxu0 0.0
      %386 = vmatprep.subr.mxu0 0.0
      %387 = vmatpush1.msra.mxu0 0.0
      %388 = vmatprep.subr.mxu0 0.0
      %389 = vmatpush1.msra.mxu0 0.0
      %390 = vmatprep.subr.mxu0 0.0
      %391 = vmatpush1.msra.mxu0 0.0
      %392 = vmatprep.subr.mxu0 0.0
      %393 = vmatpush1.msra.mxu0 0.0
      %394 = vmatprep.subr.mxu0 0.0
      %395 = vmatpush1.msra.mxu0 0.0
      %396 = vmatprep.subr.mxu0 0.0
      %397 = vmatpush1.msra.mxu0 0.0
      %398 = vmatprep.subr.mxu0 0.0
      %399 = vmatpush1.msra.mxu0 0.0
      %400 = vmatprep.subr.mxu0 0.0
      %401 = vmatpush1.msra.mxu0 0.0
      %402 = vmatprep.subr.mxu0 0.0
      %403 = vmatpush1.msra.mxu0 0.0
      %404 = vmatprep.subr.mxu0 0.0
      %405 = vmatpush1.msra.mxu0 0.0
      %406 = vmatprep.subr.mxu0 0.0
      %407 = vmatpush1.msra.mxu0 0.0
      %408 = vmatprep.subr.mxu0 0.0
      %409 = vmatpush1.msra.mxu0 0.0
      %410 = vmatprep.subr.mxu0 0.0
      %411 = vmatpush1.msra.mxu0 0.0
      %412 = vmatprep.mubr.f32.mxu0 0.0
      %413 = vmatmul.mubr.f32.gmra.mrb[0].mxu0 %v330
      %v414 = vpop.f32.mrb[0].mxu0
      %v415 = vadd.f32 0.0, %v414
      %v416 = vpop.f32.mrb[0].mxu0
      %417 = vmatprep.mubr.f32.mxu0 0.0
      %418 = vmatmul.mubr.f32.gmra.mrb[0].mxu0 %v331
      %v419 = vpop.f32.mrb[0].mxu0
      %v420 = vadd.f32 0.0, %v419
      %v421 = vpop.f32.mrb[0].mxu0
      %422 = vdwg.mxu0
      %v423 = vadd.f32 %v328, %v415
      %v424 = vadd.f32 %v329, %v420
      %425 = vst [vmem:[#allocation2] sm:$0xff] %v423
      %426 = vst [vmem:[#allocation2 + $0x8] sm:$0xff] %v424
      // Predicated region
      $region49: #{transformer_encoder_forward.10} parent=43 // pred_check
        %p427 = pneg %p322
      $region50: #{transformer_encoder_forward.10} parent=43 // pred_check_branch
        %429 = sbr.rel (%p427) target = $region52
      $region51: #{transformer_encoder_forward.10} parent=43 // pred_region
        %v430 = vld [vmem:[#allocation2] sm:$0xff]
        %v431 = vld [vmem:[#allocation2 + $0x8] sm:$0xff]
        %v432 = vld [vmem:[%s2] sm:$0x1]
        %v434 = vlaneseq
        %v435 = vshrl.u32 %v434, 7
        %v436 = vsub.s32 0, %v435
        %v437 = vrot.slane %v432, %v436
        %v439 = vadd.f32 %v430, %v437
        %v440 = vadd.f32 %v431, %v437
        %v441 = vld [vmem:[%s314] sm:$0xff]
        %v442 = vld [vmem:[%s314 + $0x8] sm:$0xff]
        %v443 = vadd.f32 %v439, %v441
        %v444 = vadd.f32 %v440, %v442
        %445 = vadd.xlane.f32.xlu0 %v443
        %v446 = vpop.xlane.xlu0 %445
        %447 = vadd.xlane.f32.xlu0 %v444
        %v448 = vpop.xlane.xlu0 %447
        %v449 = vrcp.pop 128.0
        %v450 = vmul.f32 %v446, %v449
        %v451 = vmul.f32 %v448, %v449
        %v452 = vsub.f32 %v443, %v450
        %v453 = vsub.f32 %v444, %v451
        %v454 = vmul.f32 %v452, %v452
        %v455 = vmul.f32 %v453, %v453
        %456 = vadd.xlane.f32.xlu0 %v454
        %v457 = vpop.xlane.xlu0 %456
        %458 = vadd.xlane.f32.xlu0 %v455
        %v459 = vpop.xlane.xlu0 %458
        %v460 = vmul.f32 %v457, %v449
        %v461 = vmul.f32 %v459, %v449
        %v462 = vadd.f32 %v460, 1e-05
        %v463 = vadd.f32 %v461, 1e-05
        %v464 = vrsqrt.pop %v462
        %v465 = vrsqrt.pop %v463
        %v466 = vmul.f32 %v452, %v464
        %v467 = vmul.f32 %v453, %v465
        %v468 = vld [vmem:[%s4] sm:$0x1]
        %v470 = vlaneseq
        %v471 = vshrl.u32 %v470, 7
        %v472 = vsub.s32 0, %v471
        %v473 = vrot.slane %v468, %v472
        %v475 = vmul.f32 %v466, %v473
        %v476 = vmul.f32 %v467, %v473
        %v477 = vld [vmem:[%s5] sm:$0x1]
        %v479 = vlaneseq
        %v480 = vshrl.u32 %v479, 7
        %v481 = vsub.s32 0, %v480
        %v482 = vrot.slane %v477, %v481
        %v484 = vadd.f32 %v475, %v482
        %v485 = vadd.f32 %v476, %v482
        %486 = vst [vmem:[%s320] sm:$0xff] %v484
        %487 = vst [vmem:[%s320 + $0x8] sm:$0xff] %v485
      $region52: #{transformer_encoder_forward.10} parent=43 // pred_fallthru
        _
      %s488 = smul.u32 2, %s21
      %p489 = scmp.lt.s32.totalorder %s488, 3
      %s490 = scalar_select %p489, %s488, 3
      %s491 = smul.addr %s490, 8
      %s492 = scalar_lea.vmem %s6, %s491
      // Predicated region
      $region53: #{transformer_encoder_forward.10} parent=43 // pred_check
        %p493 = pneg %p190
      $region54: #{transformer_encoder_forward.10} parent=43 // pred_check_branch
        %495 = sbr.rel (%p493) target = $region56
      $region55: #{transformer_encoder_forward.10} parent=43 // pred_region
        %s496 = smul.u32 2, %s21
      $region56: #{transformer_encoder_forward.10} parent=43 // pred_fallthru
        _
    $region44: #{transformer_encoder_forward.10} parent=5 // pred_fallthru
      _
    %p497 = scmp.le.s32.totalorder 2, %s12
    // Predicated region
    $region57: #{transformer_encoder_forward.10} parent=5 // pred_check
      %p498 = pneg %p497
    $region58: #{transformer_encoder_forward.10} parent=5 // pred_check_branch
      %500 = sbr.rel (%p498) target = $region60
    $region59: #{transformer_encoder_forward.10} parent=5 // pred_region
      %s501 = ssub.s32 %s12, 2
      // Predicated region
      $region61: #{transformer_encoder_forward.10} parent=59 // pred_check
        %p502 = pneg %p196
      $region62: #{transformer_encoder_forward.10} parent=59 // pred_check_branch
        %504 = sbr.rel (%p502) target = $region64
      $region63: #{transformer_encoder_forward.10} parent=59 // pred_region
        %s505 = smul.u32 2, %s23
        %p506 = scmp.lt.s32.totalorder %s505, 3
        %s507 = scalar_select %p506, %s505, 3
        %s508 = smul.addr %s507, 8
        %s509 = scalar_lea.vmem %s6, %s508
      $region64: #{transformer_encoder_forward.10} parent=59 // pred_fallthru
        _
    $region60: #{transformer_encoder_forward.10} parent=5 // pred_fallthru
      _
  $region6: #{transformer_encoder_forward.10} parent=0 // loop_footer
    %s16 = sadd.s32 1, %s12
  $region7: #{transformer_encoder_forward.10} parent=0 // loop_footer_branch
    %11 = sbr.rel target = $region3
  $region8: #{transformer_encoder_forward.10} parent=0 // loop_exit
    _

// kernel: transformer_encoder_forward.9
$region0: #{transformer_encoder_forward.9}
  #allocation0 [shape = 'u32[]', space=smem, size = 0x4, offset = 0x4, fixed_abs, tag = 'smem constant byte address 0x4 - core index']
  #allocation1 [shape = 'u32[144,128]{1,0:T(1,128)}', space=vmem, size = 0x12000, scoped, tag = 'internal scratch']
  %s0 = inlined_call_operand.vmem [shape: f32[2,16,384], index: 0, kind: input, shape index: {}]
  %s1 = inlined_call_operand.vmem [shape: f32[2,16,128], index: 1, kind: output, shape index: {}]
  %s2 = sld [smem:[#allocation0]]
  $region37: #{transformer_encoder_forward.9} parent=0
    _
  %s4 = ssub.s32 1, %s2
  %s5 = scalar_select 0, %s4, %s2
  loop: start=0, step=1, limit=4
  $region2: #{transformer_encoder_forward.9} parent=0 // loop_pre_header
    _
  $region3: #{transformer_encoder_forward.9} parent=0 // loop_header
    %s7 = sphi 0, %s11
    %p8 = scmp.ge.s32.totalorder %s7, 4
    %s17 = sphi 0, %s19
    %s20 = sphi 0, %s17
    %s21 = sphi 0, %s20
    %s37 = sphi 0, %s21
    %s43 = sphi 0, %s45
    %s46 = sphi 0, %s43
    %s47 = sphi 0, %s46
    %s63 = sphi 0, %s47
  $region4: #{transformer_encoder_forward.9} parent=0 // loop_header_branch
    %10 = sbr.rel (%p8) target = $region8
  $region5: #{transformer_encoder_forward.9} parent=0 // loop_body
    %s12 = ssub.s32 %s7, 1
    %s13 = ssub.s32 %s7, 2
    %s14 = sadd.s32 %s7, 1
    %s15 = ssub.s32 %s7, %s14
    %p16 = scmp.eq.s32.totalorder %s15, 0
    %s18 = sadd.s32 %s17, 1
    %s19 = scalar_select %p16, %s17, %s18
    %p22 = pneg %p16
    %p23 = scmp.eq.s32.totalorder %s7, 1
    %p24 = por %p22, %p23
    %p25 = scmp.ne.s32.totalorder %s17, %s20
    %p26 = scmp.eq.s32.totalorder %s7, 0
    %p27 = por %p25, %p26
    %p28 = scmp.ne.s32.totalorder %s17, %s20
    %p29 = scmp.eq.s32.totalorder %s12, 1
    %p30 = por %p28, %p29
    %p31 = scmp.ne.s32.totalorder %s20, %s21
    %p32 = scmp.eq.s32.totalorder %s12, 0
    %p33 = por %p31, %p32
    %p34 = scmp.ne.s32.totalorder %s20, %s21
    %p35 = scmp.eq.s32.totalorder %s13, 1
    %p36 = por %p34, %p35
    %p38 = scmp.ne.s32.totalorder %s21, %s37
    %p39 = scmp.eq.s32.totalorder %s13, 0
    %p40 = por %p38, %p39
    %s41 = ssub.s32 %s7, %s14
    %p42 = scmp.eq.s32.totalorder %s41, 0
    %s44 = sadd.s32 %s43, 1
    %s45 = scalar_select %p42, %s43, %s44
    %p48 = pneg %p42
    %p49 = scmp.eq.s32.totalorder %s7, 1
    %p50 = por %p48, %p49
    %p51 = scmp.ne.s32.totalorder %s43, %s46
    %p52 = scmp.eq.s32.totalorder %s7, 0
    %p53 = por %p51, %p52
    %p54 = scmp.ne.s32.totalorder %s43, %s46
    %p55 = scmp.eq.s32.totalorder %s12, 1
    %p56 = por %p54, %p55
    %p57 = scmp.ne.s32.totalorder %s46, %s47
    %p58 = scmp.eq.s32.totalorder %s12, 0
    %p59 = por %p57, %p58
    %p60 = scmp.ne.s32.totalorder %s46, %s47
    %p61 = scmp.eq.s32.totalorder %s13, 1
    %p62 = por %p60, %p61
    %p64 = scmp.ne.s32.totalorder %s47, %s63
    %p65 = scmp.eq.s32.totalorder %s13, 0
    %p66 = por %p64, %p65
    %p67 = scmp.le.s32.totalorder 1, %s7
    %p68 = scmp.lt.s32.totalorder %s7, 3
    %p69 = pnand %p67, %p68
    %p70 = pneg %p69
    // Predicated region
    $region9: #{transformer_encoder_forward.9} parent=5 // pred_check
      _
    $region10: #{transformer_encoder_forward.9} parent=5 // pred_check_branch
      %72 = sbr.rel (%p69) target = $region12
    $region11: #{transformer_encoder_forward.9} parent=5 // pred_region
      %s73 = ssub.s32 %s7, 1
    $region12: #{transformer_encoder_forward.9} parent=5 // pred_fallthru
      _
    %p74 = scmp.lt.s32.totalorder %s7, 2
    // Predicated region
    $region13: #{transformer_encoder_forward.9} parent=5 // pred_check
      %p75 = pneg %p74
    $region14: #{transformer_encoder_forward.9} parent=5 // pred_check_branch
      %77 = sbr.rel (%p75) target = $region16
    $region15: #{transformer_encoder_forward.9} parent=5 // pred_region
      // Predicated region
      $region17: #{transformer_encoder_forward.9} parent=15 // pred_check
        %p78 = pneg %p27
      $region18: #{transformer_encoder_forward.9} parent=15 // pred_check_branch
        %80 = sbr.rel (%p78) target = $region20
      $region19: #{transformer_encoder_forward.9} parent=15 // pred_region
        %p81 = scmp.lt.s32.totalorder %s7, 1
        %s82 = scalar_select %p81, %s7, 1
        %s83 = smul.addr %s82, 6
        %s84 = smul.addr %s83, 8
        %s85 = scalar_lea.vmem %s0, %s84
      $region20: #{transformer_encoder_forward.9} parent=15 // pred_fallthru
        _
    $region16: #{transformer_encoder_forward.9} parent=5 // pred_fallthru
      _
    %p86 = scmp.le.s32.totalorder 1, %s7
    %p87 = scmp.lt.s32.totalorder %s7, 3
    %p88 = pnand %p86, %p87
    %p89 = pneg %p88
    // Predicated region
    $region21: #{transformer_encoder_forward.9} parent=5 // pred_check
      _
    $region22: #{transformer_encoder_forward.9} parent=5 // pred_check_branch
      %91 = sbr.rel (%p88) target = $region24
    $region23: #{transformer_encoder_forward.9} parent=5 // pred_region
      %s92 = ssub.s32 %s7, 1
      %p93 = scmp.lt.s32.totalorder %s12, 1
      %s94 = scalar_select %p93, %s12, 1
      %s95 = smul.addr %s94, 6
      %s96 = smul.addr %s95, 8
      %s97 = scalar_lea.vmem %s0, %s96
      %p98 = pneg %p33
      %p99 = pneg %p30
      %p100 = pneg %p59
      %p101 = pneg %p56
      %p102 = scmp.lt.s32.totalorder %s12, 1
      %s103 = scalar_select %p102, %s12, 1
      %s104 = smul.addr %s103, 2
      %s105 = smul.addr %s104, 8
      %s106 = scalar_lea.vmem %s1, %s105
      %p107 = scmp.lt.s32.totalorder %s12, 1
      %s108 = scalar_select %p107, %s12, 1
      %s109 = smul.addr %s108, 6
      %s110 = smul.addr %s109, 8
      %s111 = scalar_lea.vmem %s0, %s110
      %p112 = scmp.lt.s32.totalorder %s12, 1
      %s113 = scalar_select %p112, %s12, 1
      %s114 = smul.addr %s113, 2
      %s115 = smul.addr %s114, 8
      %s116 = scalar_lea.vmem %s1, %s115
      %v117 = vld [vmem:[%s111] sm:$0xff]
      %v118 = vld [vmem:[%s111 + $0x8] sm:$0xff]
      %v119 = vld [vmem:[%s111 + $0x10] sm:$0xff]
      %v120 = vld [vmem:[%s111 + $0x18] sm:$0xff]
      %v121 = vld [vmem:[%s111 + $0x20] sm:$0xff]
      %v122 = vld [vmem:[%s111 + $0x28] sm:$0xff]
      %vm123 = vcmask 261120
      %v125 = vsel %vm123, %v117, 0
      %v128 = vsel %vm123, %v120, 0
      %v131 = vsel %vm123, %v118, 0
      %v134 = vsel %vm123, %v121, 0
      %136 = vmatprep.subr.mxu0 0.0
      %137 = vmatpush1.xpose.msra.mxu0 %v131
      %138 = vmatprep.subr.mxu0 0.0
      %139 = vmatpush1.xpose.msra.mxu0 %v134
      %140 = vmatprep.subr.mxu0 0.0
      %141 = vmatpush1.xpose.msra.mxu0 0.0
      %142 = vmatprep.subr.mxu0 0.0
      %143 = vmatpush1.xpose.msra.mxu0 0.0
      %144 = vmatprep.subr.mxu0 0.0
      %145 = vmatpush1.xpose.msra.mxu0 0.0
      %146 = vmatprep.subr.mxu0 0.0
      %147 = vmatpush1.xpose.msra.mxu0 0.0
      %148 = vmatprep.subr.mxu0 0.0
      %149 = vmatpush1.xpose.msra.mxu0 0.0
      %150 = vmatprep.subr.mxu0 0.0
      %151 = vmatpush1.xpose.msra.mxu0 0.0
      %152 = vmatprep.subr.mxu0 0.0
      %153 = vmatpush1.xpose.msra.mxu0 0.0
      %154 = vmatprep.subr.mxu0 0.0
      %155 = vmatpush1.xpose.msra.mxu0 0.0
      %156 = vmatprep.subr.mxu0 0.0
      %157 = vmatpush1.xpose.msra.mxu0 0.0
      %158 = vmatprep.subr.mxu0 0.0
      %159 = vmatpush1.xpose.msra.mxu0 0.0
      %160 = vmatprep.subr.mxu0 0.0
      %161 = vmatpush1.xpose.msra.mxu0 0.0
      %162 = vmatprep.subr.mxu0 0.0
      %163 = vmatpush1.xpose.msra.mxu0 0.0
      %164 = vmatprep.subr.mxu0 0.0
      %165 = vmatpush1.xpose.msra.mxu0 0.0
      %166 = vmatprep.subr.mxu0 0.0
      %167 = vmatpush1.xpose.msra.mxu0 0.0
      %168 = vmatprep.subr.mxu0 0.0
      %169 = vmatpush1.xpose.msra.mxu0 0.0
      %170 = vmatprep.subr.mxu0 0.0
      %171 = vmatpush1.xpose.msra.mxu0 0.0
      %172 = vmatprep.subr.mxu0 0.0
      %173 = vmatpush1.xpose.msra.mxu0 0.0
      %174 = vmatprep.subr.mxu0 0.0
      %175 = vmatpush1.xpose.msra.mxu0 0.0
      %176 = vmatprep.subr.mxu0 0.0
      %177 = vmatpush1.xpose.msra.mxu0 0.0
      %178 = vmatprep.subr.mxu0 0.0
      %179 = vmatpush1.xpose.msra.mxu0 0.0
      %180 = vmatprep.subr.mxu0 0.0
      %181 = vmatpush1.xpose.msra.mxu0 0.0
      %182 = vmatprep.subr.mxu0 0.0
      %183 = vmatpush1.xpose.msra.mxu0 0.0
      %184 = vmatprep.subr.mxu0 0.0
      %185 = vmatpush1.xpose.msra.mxu0 0.0
      %186 = vmatprep.subr.mxu0 0.0
      %187 = vmatpush1.xpose.msra.mxu0 0.0
      %188 = vmatprep.subr.mxu0 0.0
      %189 = vmatpush1.xpose.msra.mxu0 0.0
      %190 = vmatprep.subr.mxu0 0.0
      %191 = vmatpush1.xpose.msra.mxu0 0.0
      %192 = vmatprep.subr.mxu0 0.0
      %193 = vmatpush1.xpose.msra.mxu0 0.0
      %194 = vmatprep.subr.mxu0 0.0
      %195 = vmatpush1.xpose.msra.mxu0 0.0
      %196 = vmatprep.subr.mxu0 0.0
      %197 = vmatpush1.xpose.msra.mxu0 0.0
      %198 = vmatprep.subr.mxu0 0.0
      %199 = vmatpush1.xpose.msra.mxu0 0.0
      %200 = vmatprep.mubr.f32.mxu0 0.0
      %201 = vmatmul.mubr.f32.gmra.mrb[0].mxu0 %v125
      %v202 = vpop.f32.mrb[0].mxu0
      %v203 = vadd.f32 0.0, %v202
      %v204 = vpop.f32.mrb[0].mxu0
      %205 = vmatprep.mubr.f32.mxu0 0.0
      %206 = vmatmul.mubr.f32.gmra.mrb[0].mxu0 %v128
      %v207 = vpop.f32.mrb[0].mxu0
      %v208 = vadd.f32 0.0, %v207
      %v209 = vpop.f32.mrb[0].mxu0
      %210 = vdwg.mxu0
      %v211 = vmul.f32 %v203, 0.17677669
      %v212 = vmul.f32 %v208, 0.17677669
      %vm213 = vcmask 130048
      %v214 = vsel %vm213, %v211, -inf
      %215 = vmax.xlane.f32.xlu0 %v214
      %v216 = vpop.xlane.xlu0 %215
      %v217 = vsel %vm213, %v212, -inf
      %218 = vmax.xlane.f32.xlu0 %v217
      %v219 = vpop.xlane.xlu0 %218
      %v220 = vsub.f32 %v211, %v216
      %v221 = vsub.f32 %v212, %v219
      %v222 = vmul.f32 %v220, 1.442695
      %v223 = vpow.pop %v222
      %v224 = vmul.f32 %v221, 1.442695
      %v225 = vpow.pop %v224
      %v226 = vsel %vm213, %v223, 0.0
      %227 = vadd.xlane.f32.xlu0 %v226
      %v228 = vpop.xlane.xlu0 %227
      %v229 = vsel %vm213, %v225, 0.0
      %230 = vadd.xlane.f32.xlu0 %v229
      %v231 = vpop.xlane.xlu0 %230
      %v233 = vsel %vm213, %v223, 0
      %v236 = vsel %vm213, %v225, 0
      %238 = vmatprep.subr.mxu0 0.0
      %239 = vmatpush1.msra.mxu0 %v119
      %240 = vmatprep.subr.mxu0 0.0
      %241 = vmatpush1.msra.mxu0 %v122
      %242 = vmatprep.subr.mxu0 0.0
      %243 = vmatpush1.msra.mxu0 0.0
      %244 = vmatprep.subr.mxu0 0.0
      %245 = vmatpush1.msra.mxu0 0.0
      %246 = vmatprep.subr.mxu0 0.0
      %247 = vmatpush1.msra.mxu0 0.0
      %248 = vmatprep.subr.mxu0 0.0
      %249 = vmatpush1.msra.mxu0 0.0
      %250 = vmatprep.subr.mxu0 0.0
      %251 = vmatpush1.msra.mxu0 0.0
      %252 = vmatprep.subr.mxu0 0.0
      %253 = vmatpush1.msra.mxu0 0.0
      %254 = vmatprep.subr.mxu0 0.0
      %255 = vmatpush1.msra.mxu0 0.0
      %256 = vmatprep.subr.mxu0 0.0
      %257 = vmatpush1.msra.mxu0 0.0
      %258 = vmatprep.subr.mxu0 0.0
      %259 = vmatpush1.msra.mxu0 0.0
      %260 = vmatprep.subr.mxu0 0.0
      %261 = vmatpush1.msra.mxu0 0.0
      %262 = vmatprep.subr.mxu0 0.0
      %263 = vmatpush1.msra.mxu0 0.0
      %264 = vmatprep.subr.mxu0 0.0
      %265 = vmatpush1.msra.mxu0 0.0
      %266 = vmatprep.subr.mxu0 0.0
      %267 = vmatpush1.msra.mxu0 0.0
      %268 = vmatprep.subr.mxu0 0.0
      %269 = vmatpush1.msra.mxu0 0.0
      %270 = vmatprep.subr.mxu0 0.0
      %271 = vmatpush1.msra.mxu0 0.0
      %272 = vmatprep.subr.mxu0 0.0
      %273 = vmatpush1.msra.mxu0 0.0
      %274 = vmatprep.subr.mxu0 0.0
      %275 = vmatpush1.msra.mxu0 0.0
      %276 = vmatprep.subr.mxu0 0.0
      %277 = vmatpush1.msra.mxu0 0.0
      %278 = vmatprep.subr.mxu0 0.0
      %279 = vmatpush1.msra.mxu0 0.0
      %280 = vmatprep.subr.mxu0 0.0
      %281 = vmatpush1.msra.mxu0 0.0
      %282 = vmatprep.subr.mxu0 0.0
      %283 = vmatpush1.msra.mxu0 0.0
      %284 = vmatprep.subr.mxu0 0.0
      %285 = vmatpush1.msra.mxu0 0.0
      %286 = vmatprep.subr.mxu0 0.0
      %287 = vmatpush1.msra.mxu0 0.0
      %288 = vmatprep.subr.mxu0 0.0
      %289 = vmatpush1.msra.mxu0 0.0
      %290 = vmatprep.subr.mxu0 0.0
      %291 = vmatpush1.msra.mxu0 0.0
      %292 = vmatprep.subr.mxu0 0.0
      %293 = vmatpush1.msra.mxu0 0.0
      %294 = vmatprep.subr.mxu0 0.0
      %295 = vmatpush1.msra.mxu0 0.0
      %296 = vmatprep.subr.mxu0 0.0
      %297 = vmatpush1.msra.mxu0 0.0
      %298 = vmatprep.subr.mxu0 0.0
      %299 = vmatpush1.msra.mxu0 0.0
      %300 = vmatprep.subr.mxu0 0.0
      %301 = vmatpush1.msra.mxu0 0.0
      %302 = vmatprep.mubr.f32.mxu0 0.0
      %303 = vmatmul.mubr.f32.gmra.mrb[0].mxu0 %v233
      %v304 = vpop.f32.mrb[0].mxu0
      %v305 = vadd.f32 0.0, %v304
      %v306 = vpop.f32.mrb[0].mxu0
      %307 = vmatprep.mubr.f32.mxu0 0.0
      %308 = vmatmul.mubr.f32.gmra.mrb[0].mxu0 %v236
      %v309 = vpop.f32.mrb[0].mxu0
      %v310 = vadd.f32 0.0, %v309
      %v311 = vpop.f32.mrb[0].mxu0
      %312 = vdwg.mxu0
      %v313 = vrcp.pop %v228
      %v314 = vrcp.pop %v231
      %v315 = vmul.f32 %v305, %v313
      %v316 = vmul.f32 %v310, %v314
      %317 = vrot.lane.b32.xlu0 %v117, 96
      %v318 = vpop.permute.xlu0 %317
      %319 = vrot.lane.b32.xlu0 %v120, 96
      %v320 = vpop.permute.xlu0 %319
      %321 = vrot.lane.b32.xlu0 %v118, 96
      %v322 = vpop.permute.xlu0 %321
      %323 = vrot.lane.b32.xlu0 %v121, 96
      %v324 = vpop.permute.xlu0 %323
      %v325 = vsel %vm123, %v318, 0
      %v327 = vsel %vm123, %v320, 0
      %v329 = vsel %vm123, %v322, 0
      %v331 = vsel %vm123, %v324, 0
      %333 = vmatprep.subr.mxu0 0.0
      %334 = vmatpush1.xpose.msra.mxu0 %v329
      %335 = vmatprep.subr.mxu0 0.0
      %336 = vmatpush1.xpose.msra.mxu0 %v331
      %337 = vmatprep.subr.mxu0 0.0
      %338 = vmatpush1.xpose.msra.mxu0 0.0
      %339 = vmatprep.subr.mxu0 0.0
      %340 = vmatpush1.xpose.msra.mxu0 0.0
      %341 = vmatprep.subr.mxu0 0.0
      %342 = vmatpush1.xpose.msra.mxu0 0.0
      %343 = vmatprep.subr.mxu0 0.0
      %344 = vmatpush1.xpose.msra.mxu0 0.0
      %345 = vmatprep.subr.mxu0 0.0
      %346 = vmatpush1.xpose.msra.mxu0 0.0
      %347 = vmatprep.subr.mxu0 0.0
      %348 = vmatpush1.xpose.msra.mxu0 0.0
      %349 = vmatprep.subr.mxu0 0.0
      %350 = vmatpush1.xpose.msra.mxu0 0.0
      %351 = vmatprep.subr.mxu0 0.0
      %352 = vmatpush1.xpose.msra.mxu0 0.0
      %353 = vmatprep.subr.mxu0 0.0
      %354 = vmatpush1.xpose.msra.mxu0 0.0
      %355 = vmatprep.subr.mxu0 0.0
      %356 = vmatpush1.xpose.msra.mxu0 0.0
      %357 = vmatprep.subr.mxu0 0.0
      %358 = vmatpush1.xpose.msra.mxu0 0.0
      %359 = vmatprep.subr.mxu0 0.0
      %360 = vmatpush1.xpose.msra.mxu0 0.0
      %361 = vmatprep.subr.mxu0 0.0
      %362 = vmatpush1.xpose.msra.mxu0 0.0
      %363 = vmatprep.subr.mxu0 0.0
      %364 = vmatpush1.xpose.msra.mxu0 0.0
      %365 = vmatprep.subr.mxu0 0.0
      %366 = vmatpush1.xpose.msra.mxu0 0.0
      %367 = vmatprep.subr.mxu0 0.0
      %368 = vmatpush1.xpose.msra.mxu0 0.0
      %369 = vmatprep.subr.mxu0 0.0
      %370 = vmatpush1.xpose.msra.mxu0 0.0
      %371 = vmatprep.subr.mxu0 0.0
      %372 = vmatpush1.xpose.msra.mxu0 0.0
      %373 = vmatprep.subr.mxu0 0.0
      %374 = vmatpush1.xpose.msra.mxu0 0.0
      %375 = vmatprep.subr.mxu0 0.0
      %376 = vmatpush1.xpose.msra.mxu0 0.0
      %377 = vmatprep.subr.mxu0 0.0
      %378 = vmatpush1.xpose.msra.mxu0 0.0
      %379 = vmatprep.subr.mxu0 0.0
      %380 = vmatpush1.xpose.msra.mxu0 0.0
      %381 = vmatprep.subr.mxu0 0.0
      %382 = vmatpush1.xpose.msra.mxu0 0.0
      %383 = vmatprep.subr.mxu0 0.0
      %384 = vmatpush1.xpose.msra.mxu0 0.0
      %385 = vmatprep.subr.mxu0 0.0
      %386 = vmatpush1.xpose.msra.mxu0 0.0
      %387 = vmatprep.subr.mxu0 0.0
      %388 = vmatpush1.xpose.msra.mxu0 0.0
      %389 = vmatprep.subr.mxu0 0.0
      %390 = vmatpush1.xpose.msra.mxu0 0.0
      %391 = vmatprep.subr.mxu0 0.0
      %392 = vmatpush1.xpose.msra.mxu0 0.0
      %393 = vmatprep.subr.mxu0 0.0
      %394 = vmatpush1.xpose.msra.mxu0 0.0
      %395 = vmatprep.subr.mxu0 0.0
      %396 = vmatpush1.xpose.msra.mxu0 0.0
      %397 = vmatprep.mubr.f32.mxu0 0.0
      %398 = vmatmul.mubr.f32.gmra.mrb[0].mxu0 %v325
      %v399 = vpop.f32.mrb[0].mxu0
      %v400 = vadd.f32 0.0, %v399
      %v401 = vpop.f32.mrb[0].mxu0
      %402 = vmatprep.mubr.f32.mxu0 0.0
      %403 = vmatmul.mubr.f32.gmra.mrb[0].mxu0 %v327
      %v404 = vpop.f32.mrb[0].mxu0
      %v405 = vadd.f32 0.0, %v404
      %v406 = vpop.f32.mrb[0].mxu0
      %407 = vdwg.mxu0
      %v408 = vmul.f32 %v400, 0.17677669
      %v409 = vmul.f32 %v405, 0.17677669
      %v410 = vsel %vm213, %v408, -inf
      %411 = vmax.xlane.f32.xlu0 %v410
      %v412 = vpop.xlane.xlu0 %411
      %v413 = vsel %vm213, %v409, -inf
      %414 = vmax.xlane.f32.xlu0 %v413
      %v415 = vpop.xlane.xlu0 %414
      %v416 = vsub.f32 %v408, %v412
      %v417 = vsub.f32 %v409, %v415
      %v418 = vmul.f32 %v416, 1.442695
      %v419 = vpow.pop %v418
      %v420 = vmul.f32 %v417, 1.442695
      %v421 = vpow.pop %v420
      %v422 = vsel %vm213, %v419, 0.0
      %423 = vadd.xlane.f32.xlu0 %v422
      %v424 = vpop.xlane.xlu0 %423
      %v425 = vsel %vm213, %v421, 0.0
      %426 = vadd.xlane.f32.xlu0 %v425
      %v427 = vpop.xlane.xlu0 %426
      %430 = vrot.lane.b32.xlu0 %v119, 96
      %v431 = vpop.permute.xlu0 %430
      %432 = vrot.lane.b32.xlu0 %v122, 96
      %v433 = vpop.permute.xlu0 %432
      %v437 = vsel %vm213, %v419, 0
      %v440 = vsel %vm213, %v421, 0
      %442 = vmatprep.subr.mxu0 0.0
      %443 = vmatpush1.msra.mxu0 %v431
      %444 = vmatprep.subr.mxu0 0.0
      %445 = vmatpush1.msra.mxu0 %v433
      %446 = vmatprep.subr.mxu0 0.0
      %447 = vmatpush1.msra.mxu0 0.0
      %448 = vmatprep.subr.mxu0 0.0
      %449 = vmatpush1.msra.mxu0 0.0
      %450 = vmatprep.subr.mxu0 0.0
      %451 = vmatpush1.msra.mxu0 0.0
      %452 = vmatprep.subr.mxu0 0.0
      %453 = vmatpush1.msra.mxu0 0.0
      %454 = vmatprep.subr.mxu0 0.0
      %455 = vmatpush1.msra.mxu0 0.0
      %456 = vmatprep.subr.mxu0 0.0
      %457 = vmatpush1.msra.mxu0 0.0
      %458 = vmatprep.subr.mxu0 0.0
      %459 = vmatpush1.msra.mxu0 0.0
      %460 = vmatprep.subr.mxu0 0.0
      %461 = vmatpush1.msra.mxu0 0.0
      %462 = vmatprep.subr.mxu0 0.0
      %463 = vmatpush1.msra.mxu0 0.0
      %464 = vmatprep.subr.mxu0 0.0
      %465 = vmatpush1.msra.mxu0 0.0
      %466 = vmatprep.subr.mxu0 0.0
      %467 = vmatpush1.msra.mxu0 0.0
      %468 = vmatprep.subr.mxu0 0.0
      %469 = vmatpush1.msra.mxu0 0.0
      %470 = vmatprep.subr.mxu0 0.0
      %471 = vmatpush1.msra.mxu0 0.0
      %472 = vmatprep.subr.mxu0 0.0
      %473 = vmatpush1.msra.mxu0 0.0
      %474 = vmatprep.subr.mxu0 0.0
      %475 = vmatpush1.msra.mxu0 0.0
      %476 = vmatprep.subr.mxu0 0.0
      %477 = vmatpush1.msra.mxu0 0.0
      %478 = vmatprep.subr.mxu0 0.0
      %479 = vmatpush1.msra.mxu0 0.0
      %480 = vmatprep.subr.mxu0 0.0
      %481 = vmatpush1.msra.mxu0 0.0
      %482 = vmatprep.subr.mxu0 0.0
      %483 = vmatpush1.msra.mxu0 0.0
      %484 = vmatprep.subr.mxu0 0.0
      %485 = vmatpush1.msra.mxu0 0.0
      %486 = vmatprep.subr.mxu0 0.0
      %487 = vmatpush1.msra.mxu0 0.0
      %488 = vmatprep.subr.mxu0 0.0
      %489 = vmatpush1.msra.mxu0 0.0
      %490 = vmatprep.subr.mxu0 0.0
      %491 = vmatpush1.msra.mxu0 0.0
      %492 = vmatprep.subr.mxu0 0.0
      %493 = vmatpush1.msra.mxu0 0.0
      %494 = vmatprep.subr.mxu0 0.0
      %495 = vmatpush1.msra.mxu0 0.0
      %496 = vmatprep.subr.mxu0 0.0
      %497 = vmatpush1.msra.mxu0 0.0
      %498 = vmatprep.subr.mxu0 0.0
      %499 = vmatpush1.msra.mxu0 0.0
      %500 = vmatprep.subr.mxu0 0.0
      %501 = vmatpush1.msra.mxu0 0.0
      %502 = vmatprep.subr.mxu0 0.0
      %503 = vmatpush1.msra.mxu0 0.0
      %504 = vmatprep.subr.mxu0 0.0
      %505 = vmatpush1.msra.mxu0 0.0
      %506 = vmatprep.mubr.f32.mxu0 0.0
      %507 = vmatmul.mubr.f32.gmra.mrb[0].mxu0 %v437
      %v508 = vpop.f32.mrb[0].mxu0
      %v509 = vadd.f32 0.0, %v508
      %v510 = vpop.f32.mrb[0].mxu0
      %511 = vmatprep.mubr.f32.mxu0 0.0
      %512 = vmatmul.mubr.f32.gmra.mrb[0].mxu0 %v440
      %v513 = vpop.f32.mrb[0].mxu0
      %v514 = vadd.f32 0.0, %v513
      %v515 = vpop.f32.mrb[0].mxu0
      %516 = vdwg.mxu0
      %v517 = vrcp.pop %v424
      %v518 = vrcp.pop %v427
      %v519 = vmul.f32 %v509, %v517
      %v520 = vmul.f32 %v514, %v518
      %521 = vrot.lane.b32.xlu0 %v117, 64
      %v522 = vpop.permute.xlu0 %521
      %523 = vrot.lane.b32.xlu0 %v120, 64
      %v524 = vpop.permute.xlu0 %523
      %525 = vrot.lane.b32.xlu0 %v118, 64
      %v526 = vpop.permute.xlu0 %525
      %527 = vrot.lane.b32.xlu0 %v121, 64
      %v528 = vpop.permute.xlu0 %527
      %v529 = vsel %vm123, %v522, 0
      %v531 = vsel %vm123, %v524, 0
      %v533 = vsel %vm123, %v526, 0
      %v535 = vsel %vm123, %v528, 0
      %537 = vmatprep.subr.mxu0 0.0
      %538 = vmatpush1.xpose.msra.mxu0 %v533
      %539 = vmatprep.subr.mxu0 0.0
      %540 = vmatpush1.xpose.msra.mxu0 %v535
      %541 = vmatprep.subr.mxu0 0.0
      %542 = vmatpush1.xpose.msra.mxu0 0.0
      %543 = vmatprep.subr.mxu0 0.0
      %544 = vmatpush1.xpose.msra.mxu0 0.0
      %545 = vmatprep.subr.mxu0 0.0
      %546 = vmatpush1.xpose.msra.mxu0 0.0
      %547 = vmatprep.subr.mxu0 0.0
      %548 = vmatpush1.xpose.msra.mxu0 0.0
      %549 = vmatprep.subr.mxu0 0.0
      %550 = vmatpush1.xpose.msra.mxu0 0.0
      %551 = vmatprep.subr.mxu0 0.0
      %552 = vmatpush1.xpose.msra.mxu0 0.0
      %553 = vmatprep.subr.mxu0 0.0
      %554 = vmatpush1.xpose.msra.mxu0 0.0
      %555 = vmatprep.subr.mxu0 0.0
      %556 = vmatpush1.xpose.msra.mxu0 0.0
      %557 = vmatprep.subr.mxu0 0.0
      %558 = vmatpush1.xpose.msra.mxu0 0.0
      %559 = vmatprep.subr.mxu0 0.0
      %560 = vmatpush1.xpose.msra.mxu0 0.0
      %561 = vmatprep.subr.mxu0 0.0
      %562 = vmatpush1.xpose.msra.mxu0 0.0
      %563 = vmatprep.subr.mxu0 0.0
      %564 = vmatpush1.xpose.msra.mxu0 0.0
      %565 = vmatprep.subr.mxu0 0.0
      %566 = vmatpush1.xpose.msra.mxu0 0.0
      %567 = vmatprep.subr.mxu0 0.0
      %568 = vmatpush1.xpose.msra.mxu0 0.0
      %569 = vmatprep.subr.mxu0 0.0
      %570 = vmatpush1.xpose.msra.mxu0 0.0
      %571 = vmatprep.subr.mxu0 0.0
      %572 = vmatpush1.xpose.msra.mxu0 0.0
      %573 = vmatprep.subr.mxu0 0.0
      %574 = vmatpush1.xpose.msra.mxu0 0.0
      %575 = vmatprep.subr.mxu0 0.0
      %576 = vmatpush1.xpose.msra.mxu0 0.0
      %577 = vmatprep.subr.mxu0 0.0
      %578 = vmatpush1.xpose.msra.mxu0 0.0
      %579 = vmatprep.subr.mxu0 0.0
      %580 = vmatpush1.xpose.msra.mxu0 0.0
      %581 = vmatprep.subr.mxu0 0.0
      %582 = vmatpush1.xpose.msra.mxu0 0.0
      %583 = vmatprep.subr.mxu0 0.0
      %584 = vmatpush1.xpose.msra.mxu0 0.0
      %585 = vmatprep.subr.mxu0 0.0
      %586 = vmatpush1.xpose.msra.mxu0 0.0
      %587 = vmatprep.subr.mxu0 0.0
      %588 = vmatpush1.xpose.msra.mxu0 0.0
      %589 = vmatprep.subr.mxu0 0.0
      %590 = vmatpush1.xpose.msra.mxu0 0.0
      %591 = vmatprep.subr.mxu0 0.0
      %592 = vmatpush1.xpose.msra.mxu0 0.0
      %593 = vmatprep.subr.mxu0 0.0
      %594 = vmatpush1.xpose.msra.mxu0 0.0
      %595 = vmatprep.subr.mxu0 0.0
      %596 = vmatpush1.xpose.msra.mxu0 0.0
      %597 = vmatprep.subr.mxu0 0.0
      %598 = vmatpush1.xpose.msra.mxu0 0.0
      %599 = vmatprep.subr.mxu0 0.0
      %600 = vmatpush1.xpose.msra.mxu0 0.0
      %601 = vmatprep.mubr.f32.mxu0 0.0
      %602 = vmatmul.mubr.f32.gmra.mrb[0].mxu0 %v529
      %v603 = vpop.f32.mrb[0].mxu0
      %v604 = vadd.f32 0.0, %v603
      %v605 = vpop.f32.mrb[0].mxu0
      %606 = vmatprep.mubr.f32.mxu0 0.0
      %607 = vmatmul.mubr.f32.gmra.mrb[0].mxu0 %v531
      %v608 = vpop.f32.mrb[0].mxu0
      %v609 = vadd.f32 0.0, %v608
      %v610 = vpop.f32.mrb[0].mxu0
      %611 = vdwg.mxu0
      %v612 = vmul.f32 %v604, 0.17677669
      %v613 = vmul.f32 %v609, 0.17677669
      %v614 = vsel %vm213, %v612, -inf
      %615 = vmax.xlane.f32.xlu0 %v614
      %v616 = vpop.xlane.xlu0 %615
      %v617 = vsel %vm213, %v613, -inf
      %618 = vmax.xlane.f32.xlu0 %v617
      %v619 = vpop.xlane.xlu0 %618
      %v620 = vsub.f32 %v612, %v616
      %v621 = vsub.f32 %v613, %v619
      %v622 = vmul.f32 %v620, 1.442695
      %v623 = vpow.pop %v622
      %v624 = vmul.f32 %v621, 1.442695
      %v625 = vpow.pop %v624
      %v626 = vsel %vm213, %v623, 0.0
      %627 = vadd.xlane.f32.xlu0 %v626
      %v628 = vpop.xlane.xlu0 %627
      %v629 = vsel %vm213, %v625, 0.0
      %630 = vadd.xlane.f32.xlu0 %v629
      %v631 = vpop.xlane.xlu0 %630
      %632 = vrot.lane.b32.xlu0 %v119, 64
      %v633 = vpop.permute.xlu0 %632
      %634 = vrot.lane.b32.xlu0 %v122, 64
      %v635 = vpop.permute.xlu0 %634
      %v639 = vsel %vm213, %v623, 0
      %v642 = vsel %vm213, %v625, 0
      %644 = vmatprep.subr.mxu0 0.0
      %645 = vmatpush1.msra.mxu0 %v633
      %646 = vmatprep.subr.mxu0 0.0
      %647 = vmatpush1.msra.mxu0 %v635
      %648 = vmatprep.subr.mxu0 0.0
      %649 = vmatpush1.msra.mxu0 0.0
      %650 = vmatprep.subr.mxu0 0.0
      %651 = vmatpush1.msra.mxu0 0.0
      %652 = vmatprep.subr.mxu0 0.0
      %653 = vmatpush1.msra.mxu0 0.0
      %654 = vmatprep.subr.mxu0 0.0
      %655 = vmatpush1.msra.mxu0 0.0
      %656 = vmatprep.subr.mxu0 0.0
      %657 = vmatpush1.msra.mxu0 0.0
      %658 = vmatprep.subr.mxu0 0.0
      %659 = vmatpush1.msra.mxu0 0.0
      %660 = vmatprep.subr.mxu0 0.0
      %661 = vmatpush1.msra.mxu0 0.0
      %662 = vmatprep.subr.mxu0 0.0
      %663 = vmatpush1.msra.mxu0 0.0
      %664 = vmatprep.subr.mxu0 0.0
      %665 = vmatpush1.msra.mxu0 0.0
      %666 = vmatprep.subr.mxu0 0.0
      %667 = vmatpush1.msra.mxu0 0.0
      %668 = vmatprep.subr.mxu0 0.0
      %669 = vmatpush1.msra.mxu0 0.0
      %670 = vmatprep.subr.mxu0 0.0
      %671 = vmatpush1.msra.mxu0 0.0
      %672 = vmatprep.subr.mxu0 0.0
      %673 = vmatpush1.msra.mxu0 0.0
      %674 = vmatprep.subr.mxu0 0.0
      %675 = vmatpush1.msra.mxu0 0.0
      %676 = vmatprep.subr.mxu0 0.0
      %677 = vmatpush1.msra.mxu0 0.0
      %678 = vmatprep.subr.mxu0 0.0
      %679 = vmatpush1.msra.mxu0 0.0
      %680 = vmatprep.subr.mxu0 0.0
      %681 = vmatpush1.msra.mxu0 0.0
      %682 = vmatprep.subr.mxu0 0.0
      %683 = vmatpush1.msra.mxu0 0.0
      %684 = vmatprep.subr.mxu0 0.0
      %685 = vmatpush1.msra.mxu0 0.0
      %686 = vmatprep.subr.mxu0 0.0
      %687 = vmatpush1.msra.mxu0 0.0
      %688 = vmatprep.subr.mxu0 0.0
      %689 = vmatpush1.msra.mxu0 0.0
      %690 = vmatprep.subr.mxu0 0.0
      %691 = vmatpush1.msra.mxu0 0.0
      %692 = vmatprep.subr.mxu0 0.0
      %693 = vmatpush1.msra.mxu0 0.0
      %694 = vmatprep.subr.mxu0 0.0
      %695 = vmatpush1.msra.mxu0 0.0
      %696 = vmatprep.subr.mxu0 0.0
      %697 = vmatpush1.msra.mxu0 0.0
      %698 = vmatprep.subr.mxu0 0.0
      %699 = vmatpush1.msra.mxu0 0.0
      %700 = vmatprep.subr.mxu0 0.0
      %701 = vmatpush1.msra.mxu0 0.0
      %702 = vmatprep.subr.mxu0 0.0
      %703 = vmatpush1.msra.mxu0 0.0
      %704 = vmatprep.subr.mxu0 0.0
      %705 = vmatpush1.msra.mxu0 0.0
      %706 = vmatprep.subr.mxu0 0.0
      %707 = vmatpush1.msra.mxu0 0.0
      %708 = vmatprep.mubr.f32.mxu0 0.0
      %709 = vmatmul.mubr.f32.gmra.mrb[0].mxu0 %v639
      %v710 = vpop.f32.mrb[0].mxu0
      %v711 = vadd.f32 0.0, %v710
      %v712 = vpop.f32.mrb[0].mxu0
      %713 = vmatprep.mubr.f32.mxu0 0.0
      %714 = vmatmul.mubr.f32.gmra.mrb[0].mxu0 %v642
      %v715 = vpop.f32.mrb[0].mxu0
      %v716 = vadd.f32 0.0, %v715
      %v717 = vpop.f32.mrb[0].mxu0
      %718 = vdwg.mxu0
      %v719 = vrcp.pop %v628
      %v720 = vrcp.pop %v631
      %v721 = vmul.f32 %v711, %v719
      %v722 = vmul.f32 %v716, %v720
      %723 = vrot.lane.b32.xlu0 %v117, 32
      %v724 = vpop.permute.xlu0 %723
      %725 = vrot.lane.b32.xlu0 %v120, 32
      %v726 = vpop.permute.xlu0 %725
      %727 = vrot.lane.b32.xlu0 %v118, 32
      %v728 = vpop.permute.xlu0 %727
      %729 = vrot.lane.b32.xlu0 %v121, 32
      %v730 = vpop.permute.xlu0 %729
      %v731 = vsel %vm123, %v724, 0
      %v733 = vsel %vm123, %v726, 0
      %v735 = vsel %vm123, %v728, 0
      %v737 = vsel %vm123, %v730, 0
      %739 = vmatprep.subr.mxu0 0.0
      %740 = vmatpush1.xpose.msra.mxu0 %v735
      %741 = vmatprep.subr.mxu0 0.0
      %742 = vmatpush1.xpose.msra.mxu0 %v737
      %743 = vmatprep.subr.mxu0 0.0
      %744 = vmatpush1.xpose.msra.mxu0 0.0
      %745 = vmatprep.subr.mxu0 0.0
      %746 = vmatpush1.xpose.msra.mxu0 0.0
      %747 = vmatprep.subr.mxu0 0.0
      %748 = vmatpush1.xpose.msra.mxu0 0.0
      %749 = vmatprep.subr.mxu0 0.0
      %750 = vmatpush1.xpose.msra.mxu0 0.0
      %751 = vmatprep.subr.mxu0 0.0
      %752 = vmatpush1.xpose.msra.mxu0 0.0
      %753 = vmatprep.subr.mxu0 0.0
      %754 = vmatpush1.xpose.msra.mxu0 0.0
      %755 = vmatprep.subr.mxu0 0.0
      %756 = vmatpush1.xpose.msra.mxu0 0.0
      %757 = vmatprep.subr.mxu0 0.0
      %758 = vmatpush1.xpose.msra.mxu0 0.0
      %759 = vmatprep.subr.mxu0 0.0
      %760 = vmatpush1.xpose.msra.mxu0 0.0
      %761 = vmatprep.subr.mxu0 0.0
      %762 = vmatpush1.xpose.msra.mxu0 0.0
      %763 = vmatprep.subr.mxu0 0.0
      %764 = vmatpush1.xpose.msra.mxu0 0.0
      %765 = vmatprep.subr.mxu0 0.0
      %766 = vmatpush1.xpose.msra.mxu0 0.0
      %767 = vmatprep.subr.mxu0 0.0
      %768 = vmatpush1.xpose.msra.mxu0 0.0
      %769 = vmatprep.subr.mxu0 0.0
      %770 = vmatpush1.xpose.msra.mxu0 0.0
      %771 = vmatprep.subr.mxu0 0.0
      %772 = vmatpush1.xpose.msra.mxu0 0.0
      %773 = vmatprep.subr.mxu0 0.0
      %774 = vmatpush1.xpose.msra.mxu0 0.0
      %775 = vmatprep.subr.mxu0 0.0
      %776 = vmatpush1.xpose.msra.mxu0 0.0
      %777 = vmatprep.subr.mxu0 0.0
      %778 = vmatpush1.xpose.msra.mxu0 0.0
      %779 = vmatprep.subr.mxu0 0.0
      %780 = vmatpush1.xpose.msra.mxu0 0.0
      %781 = vmatprep.subr.mxu0 0.0
      %782 = vmatpush1.xpose.msra.mxu0 0.0
      %783 = vmatprep.subr.mxu0 0.0
      %784 = vmatpush1.xpose.msra.mxu0 0.0
      %785 = vmatprep.subr.mxu0 0.0
      %786 = vmatpush1.xpose.msra.mxu0 0.0
      %787 = vmatprep.subr.mxu0 0.0
      %788 = vmatpush1.xpose.msra.mxu0 0.0
      %789 = vmatprep.subr.mxu0 0.0
      %790 = vmatpush1.xpose.msra.mxu0 0.0
      %791 = vmatprep.subr.mxu0 0.0
      %792 = vmatpush1.xpose.msra.mxu0 0.0
      %793 = vmatprep.subr.mxu0 0.0
      %794 = vmatpush1.xpose.msra.mxu0 0.0
      %795 = vmatprep.subr.mxu0 0.0
      %796 = vmatpush1.xpose.msra.mxu0 0.0
      %797 = vmatprep.subr.mxu0 0.0
      %798 = vmatpush1.xpose.msra.mxu0 0.0
      %799 = vmatprep.subr.mxu0 0.0
      %800 = vmatpush1.xpose.msra.mxu0 0.0
      %801 = vmatprep.subr.mxu0 0.0
      %802 = vmatpush1.xpose.msra.mxu0 0.0
      %803 = vmatprep.mubr.f32.mxu0 0.0
      %804 = vmatmul.mubr.f32.gmra.mrb[0].mxu0 %v731
      %v805 = vpop.f32.mrb[0].mxu0
      %v806 = vadd.f32 0.0, %v805
      %v807 = vpop.f32.mrb[0].mxu0
      %808 = vmatprep.mubr.f32.mxu0 0.0
      %809 = vmatmul.mubr.f32.gmra.mrb[0].mxu0 %v733
      %v810 = vpop.f32.mrb[0].mxu0
      %v811 = vadd.f32 0.0, %v810
      %v812 = vpop.f32.mrb[0].mxu0
      %813 = vdwg.mxu0
      %v814 = vmul.f32 %v806, 0.17677669
      %v815 = vmul.f32 %v811, 0.17677669
      %v816 = vsel %vm213, %v814, -inf
      %817 = vmax.xlane.f32.xlu0 %v816
      %v818 = vpop.xlane.xlu0 %817
      %v819 = vsel %vm213, %v815, -inf
      %820 = vmax.xlane.f32.xlu0 %v819
      %v821 = vpop.xlane.xlu0 %820
      %v822 = vsub.f32 %v814, %v818
      %v823 = vsub.f32 %v815, %v821
      %v824 = vmul.f32 %v822, 1.442695
      %v825 = vpow.pop %v824
      %v826 = vmul.f32 %v823, 1.442695
      %v827 = vpow.pop %v826
      %v828 = vsel %vm213, %v825, 0.0
      %829 = vadd.xlane.f32.xlu0 %v828
      %v830 = vpop.xlane.xlu0 %829
      %v831 = vsel %vm213, %v827, 0.0
      %832 = vadd.xlane.f32.xlu0 %v831
      %v833 = vpop.xlane.xlu0 %832
      %834 = vrot.lane.b32.xlu0 %v119, 32
      %v835 = vpop.permute.xlu0 %834
      %836 = vrot.lane.b32.xlu0 %v122, 32
      %v837 = vpop.permute.xlu0 %836
      %v841 = vsel %vm213, %v825, 0
      %v844 = vsel %vm213, %v827, 0
      %846 = vmatprep.subr.mxu0 0.0
      %847 = vmatpush1.msra.mxu0 %v835
      %848 = vmatprep.subr.mxu0 0.0
      %849 = vmatpush1.msra.mxu0 %v837
      %850 = vmatprep.subr.mxu0 0.0
      %851 = vmatpush1.msra.mxu0 0.0
      %852 = vmatprep.subr.mxu0 0.0
      %853 = vmatpush1.msra.mxu0 0.0
      %854 = vmatprep.subr.mxu0 0.0
      %855 = vmatpush1.msra.mxu0 0.0
      %856 = vmatprep.subr.mxu0 0.0
      %857 = vmatpush1.msra.mxu0 0.0
      %858 = vmatprep.subr.mxu0 0.0
      %859 = vmatpush1.msra.mxu0 0.0
      %860 = vmatprep.subr.mxu0 0.0
      %861 = vmatpush1.msra.mxu0 0.0
      %862 = vmatprep.subr.mxu0 0.0
      %863 = vmatpush1.msra.mxu0 0.0
      %864 = vmatprep.subr.mxu0 0.0
      %865 = vmatpush1.msra.mxu0 0.0
      %866 = vmatprep.subr.mxu0 0.0
      %867 = vmatpush1.msra.mxu0 0.0
      %868 = vmatprep.subr.mxu0 0.0
      %869 = vmatpush1.msra.mxu0 0.0
      %870 = vmatprep.subr.mxu0 0.0
      %871 = vmatpush1.msra.mxu0 0.0
      %872 = vmatprep.subr.mxu0 0.0
      %873 = vmatpush1.msra.mxu0 0.0
      %874 = vmatprep.subr.mxu0 0.0
      %875 = vmatpush1.msra.mxu0 0.0
      %876 = vmatprep.subr.mxu0 0.0
      %877 = vmatpush1.msra.mxu0 0.0
      %878 = vmatprep.subr.mxu0 0.0
      %879 = vmatpush1.msra.mxu0 0.0
      %880 = vmatprep.subr.mxu0 0.0
      %881 = vmatpush1.msra.mxu0 0.0
      %882 = vmatprep.subr.mxu0 0.0
      %883 = vmatpush1.msra.mxu0 0.0
      %884 = vmatprep.subr.mxu0 0.0
      %885 = vmatpush1.msra.mxu0 0.0
      %886 = vmatprep.subr.mxu0 0.0
      %887 = vmatpush1.msra.mxu0 0.0
      %888 = vmatprep.subr.mxu0 0.0
      %889 = vmatpush1.msra.mxu0 0.0
      %890 = vmatprep.subr.mxu0 0.0
      %891 = vmatpush1.msra.mxu0 0.0
      %892 = vmatprep.subr.mxu0 0.0
      %893 = vmatpush1.msra.mxu0 0.0
      %894 = vmatprep.subr.mxu0 0.0
      %895 = vmatpush1.msra.mxu0 0.0
      %896 = vmatprep.subr.mxu0 0.0
      %897 = vmatpush1.msra.mxu0 0.0
      %898 = vmatprep.subr.mxu0 0.0
      %899 = vmatpush1.msra.mxu0 0.0
      %900 = vmatprep.subr.mxu0 0.0
      %901 = vmatpush1.msra.mxu0 0.0
      %902 = vmatprep.subr.mxu0 0.0
      %903 = vmatpush1.msra.mxu0 0.0
      %904 = vmatprep.subr.mxu0 0.0
      %905 = vmatpush1.msra.mxu0 0.0
      %906 = vmatprep.subr.mxu0 0.0
      %907 = vmatpush1.msra.mxu0 0.0
      %908 = vmatprep.subr.mxu0 0.0
      %909 = vmatpush1.msra.mxu0 0.0
      %910 = vmatprep.mubr.f32.mxu0 0.0
      %911 = vmatmul.mubr.f32.gmra.mrb[0].mxu0 %v841
      %v912 = vpop.f32.mrb[0].mxu0
      %v913 = vadd.f32 0.0, %v912
      %v914 = vpop.f32.mrb[0].mxu0
      %915 = vmatprep.mubr.f32.mxu0 0.0
      %916 = vmatmul.mubr.f32.gmra.mrb[0].mxu0 %v844
      %v917 = vpop.f32.mrb[0].mxu0
      %v918 = vadd.f32 0.0, %v917
      %v919 = vpop.f32.mrb[0].mxu0
      %920 = vdwg.mxu0
      %v921 = vrcp.pop %v830
      %v922 = vrcp.pop %v833
      %v923 = vmul.f32 %v913, %v921
      %v924 = vmul.f32 %v918, %v922
      %927 = vrot.lane.b32.xlu0 %v519, 32
      %v928 = vpop.permute.xlu0 %927
      %929 = vrot.lane.b32.xlu0 %v520, 32
      %v930 = vpop.permute.xlu0 %929
      %935 = vrot.lane.b32.xlu0 %v721, 64
      %v936 = vpop.permute.xlu0 %935
      %937 = vrot.lane.b32.xlu0 %v722, 64
      %v938 = vpop.permute.xlu0 %937
      %943 = vrot.lane.b32.xlu0 %v923, 96
      %v944 = vpop.permute.xlu0 %943
      %945 = vrot.lane.b32.xlu0 %v924, 96
      %v946 = vpop.permute.xlu0 %945
      %v949 = vsel %vm123, %v315, %v928
      %v950 = vsel %vm123, %v316, %v930
      %vm951 = vcmask 523264
      %v952 = vsel %vm951, %v949, %v936
      %v953 = vsel %vm951, %v950, %v938
      %vm954 = vcmask 785408
      %v955 = vsel %vm954, %v952, %v944
      %v956 = vsel %vm954, %v953, %v946
      %957 = vst [vmem:[%s116] sm:$0xff] %v955
      %958 = vst [vmem:[%s116 + $0x8] sm:$0xff] %v956
      %p959 = scmp.lt.s32.totalorder %s12, 1
      %s960 = scalar_select %p959, %s12, 1
      %s961 = smul.addr %s960, 2
      %s962 = smul.addr %s961, 8
      %s963 = scalar_lea.vmem %s1, %s962
      // Predicated region
      $region25: #{transformer_encoder_forward.9} parent=23 // pred_check
        %p964 = pneg %p56
      $region26: #{transformer_encoder_forward.9} parent=23 // pred_check_branch
        %966 = sbr.rel (%p964) target = $region28
      $region27: #{transformer_encoder_forward.9} parent=23 // pred_region
        _
      $region28: #{transformer_encoder_forward.9} parent=23 // pred_fallthru
        _
    $region24: #{transformer_encoder_forward.9} parent=5 // pred_fallthru
      _
    %p967 = scmp.le.s32.totalorder 2, %s7
    // Predicated region
    $region29: #{transformer_encoder_forward.9} parent=5 // pred_check
      %p968 = pneg %p967
    $region30: #{transformer_encoder_forward.9} parent=5 // pred_check_branch
      %970 = sbr.rel (%p968) target = $region32
    $region31: #{transformer_encoder_forward.9} parent=5 // pred_region
      %s971 = ssub.s32 %s7, 2
      // Predicated region
      $region33: #{transformer_encoder_forward.9} parent=31 // pred_check
        %p972 = pneg %p62
      $region34: #{transformer_encoder_forward.9} parent=31 // pred_check_branch
        %974 = sbr.rel (%p972) target = $region36
      $region35: #{transformer_encoder_forward.9} parent=31 // pred_region
        %p975 = scmp.lt.s32.totalorder %s13, 1
        %s976 = scalar_select %p975, %s13, 1
        %s977 = smul.addr %s976, 2
        %s978 = smul.addr %s977, 8
        %s979 = scalar_lea.vmem %s1, %s978
      $region36: #{transformer_encoder_forward.9} parent=31 // pred_fallthru
        _
    $region32: #{transformer_encoder_forward.9} parent=5 // pred_fallthru
      _
  $region6: #{transformer_encoder_forward.9} parent=0 // loop_footer
    %s11 = sadd.s32 1, %s7
  $region7: #{transformer_encoder_forward.9} parent=0 // loop_footer_branch
    %6 = sbr.rel target = $region3
  $region8: #{transformer_encoder_forward.9} parent=0 // loop_exit
    _

</llo_original>
